<compile_context>
chip_gen: v5e
topology: v5e:2x2
jax: 0.10.0
libtpu: 0.0.40
codegen_flags: <defaults>
</compile_context>

<pallas_src>
import math
import functools

import jax
import jax.numpy as jnp
from jax import lax
from jax.experimental import pallas as pl
from jax.experimental.pallas import tpu as pltpu


def _layernorm(x, gamma, beta, eps=1e-5):
    mean = jnp.mean(x, axis=-1, keepdims=True)
    var = jnp.mean((x - mean) ** 2, axis=-1, keepdims=True)
    return (x - mean) * lax.rsqrt(var + eps) * gamma + beta


def transformer_block_kernel(x_ref, wqkv_ref, wprojh_ref, w1_ref, b1_ref,
                             w2_ref, b2_ref, g1_ref, bt1_ref, g2_ref, bt2_ref,
                             o_ref, q_scr, k_scr, v_scr, *, n_heads, tq):
    qi = pl.program_id(1)
    C, E = x_ref.shape[1], x_ref.shape[2]
    hd = E // n_heads

    # ---- once per batch element: fused QKV projection for the full sequence ----
    @pl.when(qi == 0)
    def _project_qkv():
        xf = x_ref[0].astype(jnp.float32)                                    # (C, E)
        a = _layernorm(xf, g1_ref[0], bt1_ref[0])
        qkv = jnp.dot(a, wqkv_ref[...], preferred_element_type=jnp.float32)  # (C, 3E)
        scale = C ** (-0.5)   # NOTE: reference scales by sequence length, not head dim
        for h in range(n_heads):                                             # static head split
            q_scr[h] = qkv[:, h * hd:(h + 1) * hd] * scale                   # scale folded into Q
            k_scr[h] = qkv[:, E + h * hd:E + (h + 1) * hd]
            v_scr[h] = qkv[:, 2 * E + h * hd:2 * E + (h + 1) * hd]

    # ---- per query-tile attention (head-batched, no concatenate) ----
    start = pl.multiple_of(qi * tq, tq)
    x_t = x_ref[0, pl.ds(start, tq), :].astype(jnp.float32)                  # (tq, E)
    qh = q_scr[:, pl.ds(start, tq), :]                                       # (H, tq, hd)
    kh = k_scr[...]                                                          # (H, C,  hd)
    vh = v_scr[...]                                                          # (H, C,  hd)

    s = jnp.einsum('htd,hcd->htc', qh, kh,
                   preferred_element_type=jnp.float32)                       # (H, tq, C)
    s = s - jnp.max(s, axis=-1, keepdims=True)
    p = jnp.exp(s)
    p = p * pl.reciprocal(jnp.sum(p, axis=-1, keepdims=True), approx=False)
    oh = jnp.einsum('htc,hcd->htd', p, vh,
                    preferred_element_type=jnp.float32)                      # (H, tq, hd)

    # output projection: concat(heads) @ wproj  ==  sum_h  oh[h] @ wproj[h*hd:(h+1)*hd, :]
    attn = jnp.sum(jnp.einsum('htd,hde->hte', oh, wprojh_ref[...],
                              preferred_element_type=jnp.float32), axis=0)   # (tq, E)

    x1 = x_t + attn

    # ---- MLP branch ----
    m = _layernorm(x1, g2_ref[0], bt2_ref[0])
    h1 = jnp.dot(m, w1_ref[...], preferred_element_type=jnp.float32) + b1_ref[0]
    h1 = 0.5 * h1 * (1.0 + lax.erf(h1 * (1.0 / math.sqrt(2.0))))             # exact GELU
    mout = jnp.dot(h1, w2_ref[...], preferred_element_type=jnp.float32) + b2_ref[0]

    o_ref[0] = (x1 + mout).astype(o_ref.dtype)


def transformer_block(x, params, *, n_heads, tq=None):
    B, C, E = x.shape
    H = params["w1"].shape[1]
    hd = E // n_heads
    assert E % n_heads == 0, "n_embed must be divisible by n_heads"

    if tq is None:
        tq = C if C <= 128 else 128
    assert C % tq == 0, "sequence length must be divisible by the query tile"
    nq = C // tq

    # Fused QKV weight (E, 3E) and head-major output-projection weight (n_heads, hd, E).
    wqkv = jnp.concatenate([params["wq"], params["wk"], params["wv"]], axis=1)
    wprojh = params["wproj"].reshape(n_heads, hd, E)

    def fixed(shape):
        n = len(shape)
        return pl.BlockSpec(shape, lambda b, q, _n=n: (0,) * _n)

    in_specs = [
        pl.BlockSpec((1, C, E), lambda b, q: (b, 0, 0)),   # x (resident across query tiles)
        fixed((E, 3 * E)),                                 # fused wqkv
        fixed((n_heads, hd, E)),                           # wproj (head-major)
        fixed((E, H)),                                     # w1
        fixed((1, H)),                                     # b1
        fixed((H, E)),                                     # w2
        fixed((1, E)),                                     # b2
        fixed((1, E)),                                     # attn-LN gamma
        fixed((1, E)),                                     # attn-LN beta
        fixed((1, E)),                                     # mlp-LN gamma
        fixed((1, E)),                                     # mlp-LN beta
    ]

    # VMEM budget: resident weights (double-buffered by Pallas), QKV scratch, x/out blocks,
    # plus per-step intermediates (scores, MLP hidden). 2x headroom, capped at 64 MiB (v7x).
    f32 = 4
    weight_b = (3 * E * E + E * E + E * H + H + H * E + E + 4 * E) * f32
    scratch_b = 3 * C * E * f32
    io_b = 2 * (C * E + tq * E) * f32
    act_b = (n_heads * tq * C + tq * H + 6 * tq * E) * f32
    vmem_limit = int(min(64 * 2**20,
                         max(16 * 2**20, 2 * (2 * weight_b + scratch_b + io_b + act_b))))

    kernel = functools.partial(transformer_block_kernel, n_heads=n_heads, tq=tq)
    return pl.pallas_call(
        kernel,
        out_shape=jax.ShapeDtypeStruct((B, C, E), x.dtype),
        grid_spec=pltpu.PrefetchScalarGridSpec(
            num_scalar_prefetch=0,
            grid=(B, nq),
            in_specs=in_specs,
            out_specs=pl.BlockSpec((1, tq, E), lambda b, q: (b, q, 0)),
            scratch_shapes=[pltpu.VMEM((n_heads, C, hd), jnp.float32),   # Q (pre-scaled)
                            pltpu.VMEM((n_heads, C, hd), jnp.float32),   # K
                            pltpu.VMEM((n_heads, C, hd), jnp.float32)],  # V
        ),
        compiler_params=pltpu.CompilerParams(
            dimension_semantics=("parallel", "arbitrary"),
            vmem_limit_bytes=vmem_limit),
    )(x, wqkv, wprojh, params["w1"], params["b1"], params["w2"], params["b2"],
      params["ln1_g"], params["ln1_b"], params["ln2_g"], params["ln2_b"])


def init_params(key, n_embed, n_heads, mlp_factor=4):
    H = n_embed * mlp_factor
    ks = jax.random.split(key, 8)
    scale = 0.02
    params = {
        # packed per-head q/k/v projections, columns grouped by head (matches torch concat order)
        "wq": scale * jax.random.normal(ks[0], (n_embed, n_embed), jnp.float32),
        "wk": scale * jax.random.normal(ks[1], (n_embed, n_embed), jnp.float32),
        "wv": scale * jax.random.normal(ks[2], (n_embed, n_embed), jnp.float32),
        "wproj": scale * jax.random.normal(ks[3], (n_embed, n_embed), jnp.float32),
        "w1": scale * jax.random.normal(ks[4], (n_embed, H), jnp.float32),
        "b1": scale * jax.random.normal(ks[5], (1, H), jnp.float32),
        "w2": scale * jax.random.normal(ks[6], (H, n_embed), jnp.float32),
        "b2": scale * jax.random.normal(ks[7], (1, n_embed), jnp.float32),
        # LayerNorm init matches torch defaults (weight=1, bias=0)
        "ln1_g": jnp.ones((1, n_embed), jnp.float32),
        "ln1_b": jnp.zeros((1, n_embed), jnp.float32),
        "ln2_g": jnp.ones((1, n_embed), jnp.float32),
        "ln2_b": jnp.zeros((1, n_embed), jnp.float32),
    }
    return params


def reference_block(x, params, *, n_heads):
    """Plain-JAX reference mirroring the PyTorch module, for correctness checking."""
    B, C, E = x.shape
    hd = E // n_heads

    def ln(v, g, b, eps=1e-5):
        mu = v.mean(-1, keepdims=True)
        var = ((v - mu) ** 2).mean(-1, keepdims=True)
        return (v - mu) / jnp.sqrt(var + eps) * g + b

    a = ln(x, params["ln1_g"][0], params["ln1_b"][0])
    q = a @ params["wq"]; k = a @ params["wk"]; v = a @ params["wv"]
    outs = []
    for h in range(n_heads):
        qh, kh, vh = (t[..., h * hd:(h + 1) * hd] for t in (q, k, v))
        s = jnp.einsum("bcd,bed->bce", qh, kh) * C ** (-0.5)
        p = jax.nn.softmax(s, axis=-1)
        outs.append(jnp.einsum("bce,bed->bcd", p, vh))
    attn = jnp.concatenate(outs, -1) @ params["wproj"]
    x1 = x + attn
    m = ln(x1, params["ln2_g"][0], params["ln2_b"][0])
    h1 = m @ params["w1"] + params["b1"][0]
    h1 = 0.5 * h1 * (1.0 + lax.erf(h1 / math.sqrt(2.0)))
    return x1 + (h1 @ params["w2"] + params["b2"][0])


if __name__ == "__main__":
    B, C, E = 2, 8, 32          # batch, sequence, n_embed
    n_heads = 4

    key = jax.random.PRNGKey(0)
    kx, kp = jax.random.split(key)
    x = jax.random.normal(kx, (B, C, E), jnp.float32)
    params = init_params(kp, E, n_heads)

    out = transformer_block(x, params, n_heads=n_heads)
    out = jax.block_until_ready(out)

    ref = reference_block(x, params, n_heads=n_heads)
    assert out.shape == (B, C, E)
    assert jnp.allclose(out, ref, atol=1e-4, rtol=1e-4), "mismatch vs JAX reference"

    print("KERNEL_OK")
</pallas_src>

<mosaic_0001>
module attributes {stable_mosaic.version = 11 : i64} {
  func.func @transformer_block_kernel(%arg0: i32, %arg1: i32, %arg2: memref<1x8x32xf32, #tpu.memory_space<vmem>>, %arg3: memref<32x96xf32, #tpu.memory_space<vmem>>, %arg4: memref<4x8x32xf32, #tpu.memory_space<vmem>>, %arg5: memref<32x128xf32, #tpu.memory_space<vmem>>, %arg6: memref<1x128xf32, #tpu.memory_space<vmem>>, %arg7: memref<128x32xf32, #tpu.memory_space<vmem>>, %arg8: memref<1x32xf32, #tpu.memory_space<vmem>>, %arg9: memref<1x32xf32, #tpu.memory_space<vmem>>, %arg10: memref<1x32xf32, #tpu.memory_space<vmem>>, %arg11: memref<1x32xf32, #tpu.memory_space<vmem>>, %arg12: memref<1x32xf32, #tpu.memory_space<vmem>>, %arg13: memref<1x8x32xf32, #tpu.memory_space<vmem>>, %arg14: memref<4x8x8xf32, #tpu.memory_space<vmem>>, %arg15: memref<4x8x8xf32, #tpu.memory_space<vmem>>, %arg16: memref<4x8x8xf32, #tpu.memory_space<vmem>>) attributes {dimension_semantics = [#tpu.dimension_semantics<parallel>, #tpu.dimension_semantics<arbitrary>], iteration_bounds = array<i64: 2, 1>, scalar_prefetch = 0 : i64, scratch_operands = 3 : i64, tpu.core_type = #tpu.core_type<tc>, window_params = [{transform_indices = @transform_0, window_bounds = array<i64: 1, 8, 32>}, {pipeline_mode = #tpu.pipeline_mode<synchronous>, transform_indices = @transform_1, window_bounds = array<i64: 32, 96>}, {pipeline_mode = #tpu.pipeline_mode<synchronous>, transform_indices = @transform_2, window_bounds = array<i64: 4, 8, 32>}, {pipeline_mode = #tpu.pipeline_mode<synchronous>, transform_indices = @transform_3, window_bounds = array<i64: 32, 128>}, {pipeline_mode = #tpu.pipeline_mode<synchronous>, transform_indices = @transform_4, window_bounds = array<i64: 1, 128>}, {pipeline_mode = #tpu.pipeline_mode<synchronous>, transform_indices = @transform_5, window_bounds = array<i64: 128, 32>}, {pipeline_mode = #tpu.pipeline_mode<synchronous>, transform_indices = @transform_6, window_bounds = array<i64: 1, 32>}, {pipeline_mode = #tpu.pipeline_mode<synchronous>, transform_indices = @transform_7, window_bounds = array<i64: 1, 32>}, {pipeline_mode = #tpu.pipeline_mode<synchronous>, transform_indices = @transform_8, window_bounds = array<i64: 1, 32>}, {pipeline_mode = #tpu.pipeline_mode<synchronous>, transform_indices = @transform_9, window_bounds = array<i64: 1, 32>}, {pipeline_mode = #tpu.pipeline_mode<synchronous>, transform_indices = @transform_10, window_bounds = array<i64: 1, 32>}, {transform_indices = @transform_11, window_bounds = array<i64: 1, 8, 32>}]} {
    %c0_i32 = arith.constant 0 : i32
    %0 = arith.cmpi eq, %arg1, %c0_i32 : i32
    %1 = arith.extui %0 : i1 to i32
    %c0_i32_0 = arith.constant 0 : i32
    %2 = arith.cmpi ne, %1, %c0_i32_0 : i32
    scf.if %2 {
      %c0_43 = arith.constant 0 : index
      %c0_44 = arith.constant 0 : index
      %c0_45 = arith.constant 0 : index
      %82 = vector.load %arg2[%c0_43, %c0_44, %c0_45] : memref<1x8x32xf32, #tpu.memory_space<vmem>>, vector<1x8x32xf32>
      %83 = vector.shape_cast %82 : vector<1x8x32xf32> to vector<8x32xf32>
      %c0_46 = arith.constant 0 : index
      %c0_47 = arith.constant 0 : index
      %84 = vector.load %arg9[%c0_46, %c0_47] : memref<1x32xf32, #tpu.memory_space<vmem>>, vector<1x32xf32>
      %85 = vector.shape_cast %84 : vector<1x32xf32> to vector<32xf32>
      %c0_48 = arith.constant 0 : index
      %c0_49 = arith.constant 0 : index
      %86 = vector.load %arg10[%c0_48, %c0_49] : memref<1x32xf32, #tpu.memory_space<vmem>>, vector<1x32xf32>
      %87 = vector.shape_cast %86 : vector<1x32xf32> to vector<32xf32>
      %cst_50 = arith.constant dense<0.000000e+00> : vector<8xf32>
      %88 = vector.multi_reduction <add>, %83, %cst_50 [1] : vector<8x32xf32> to vector<8xf32>
      %89 = vector.shape_cast %88 : vector<8xf32> to vector<8x1xf32>
      %cst_51 = arith.constant 3.200000e+01 : f32
      %90 = vector.broadcast %cst_51 : f32 to vector<8x1xf32>
      %91 = arith.divf %89, %90 : vector<8x1xf32>
      %92 = vector.broadcast %91 : vector<8x1xf32> to vector<8x32xf32>
      %93 = arith.subf %83, %92 : vector<8x32xf32>
      %94 = arith.mulf %93, %93 : vector<8x32xf32>
      %cst_52 = arith.constant dense<0.000000e+00> : vector<8xf32>
      %95 = vector.multi_reduction <add>, %94, %cst_52 [1] : vector<8x32xf32> to vector<8xf32>
      %96 = vector.shape_cast %95 : vector<8xf32> to vector<8x1xf32>
      %cst_53 = arith.constant 3.200000e+01 : f32
      %97 = vector.broadcast %cst_53 : f32 to vector<8x1xf32>
      %98 = arith.divf %96, %97 : vector<8x1xf32>
      %99 = vector.broadcast %91 : vector<8x1xf32> to vector<8x32xf32>
      %100 = arith.subf %83, %99 : vector<8x32xf32>
      %cst_54 = arith.constant 9.99999974E-6 : f32
      %101 = vector.broadcast %cst_54 : f32 to vector<8x1xf32>
      %102 = arith.addf %98, %101 : vector<8x1xf32>
      %103 = math.rsqrt %102 : vector<8x1xf32>
      %104 = vector.broadcast %103 : vector<8x1xf32> to vector<8x32xf32>
      %105 = arith.mulf %100, %104 : vector<8x32xf32>
      %106 = vector.shape_cast %85 : vector<32xf32> to vector<1x32xf32>
      %107 = vector.broadcast %106 : vector<1x32xf32> to vector<8x32xf32>
      %108 = arith.mulf %105, %107 : vector<8x32xf32>
      %109 = vector.shape_cast %87 : vector<32xf32> to vector<1x32xf32>
      %110 = vector.broadcast %109 : vector<1x32xf32> to vector<8x32xf32>
      %111 = arith.addf %108, %110 : vector<8x32xf32>
      %c0_55 = arith.constant 0 : index
      %c0_56 = arith.constant 0 : index
      %112 = vector.load %arg3[%c0_55, %c0_56] : memref<32x96xf32, #tpu.memory_space<vmem>>, vector<32x96xf32>
      %cst_57 = arith.constant dense<0.000000e+00> : vector<8x96xf32>
      %113 = tpu.matmul %111, %112, %cst_57 {dimension_numbers = #tpu.dot_dimension_numbers<[1], [0], [0], [1], [0, 0, 1, 1], [], []>} : vector<8x32xf32>, vector<32x96xf32>, vector<8x96xf32> -> vector<8x96xf32>
      %114 = vector.extract_strided_slice %113 {offsets = [0, 0], sizes = [8, 8], strides = [1, 1]} : vector<8x96xf32> to vector<8x8xf32>
      %cst_58 = arith.constant 0.353553385 : f32
      %115 = vector.broadcast %cst_58 : f32 to vector<8x8xf32>
      %116 = arith.mulf %114, %115 : vector<8x8xf32>
      %c0_59 = arith.constant 0 : index
      %c0_60 = arith.constant 0 : index
      %c0_61 = arith.constant 0 : index
      %117 = vector.load %arg14[%c0_59, %c0_60, %c0_61] : memref<4x8x8xf32, #tpu.memory_space<vmem>>, vector<1x8x8xf32>
      %118 = vector.shape_cast %117 : vector<1x8x8xf32> to vector<8x8xf32>
      %119 = vector.shape_cast %116 : vector<8x8xf32> to vector<1x8x8xf32>
      tpu.vector_store %arg14[%c0_59, %c0_60, %c0_61], %119 {strides = array<i32>} : memref<4x8x8xf32, #tpu.memory_space<vmem>>, vector<1x8x8xf32>,
      %120 = vector.extract_strided_slice %113 {offsets = [0, 32], sizes = [8, 8], strides = [1, 1]} : vector<8x96xf32> to vector<8x8xf32>
      %c0_62 = arith.constant 0 : index
      %c0_63 = arith.constant 0 : index
      %c0_64 = arith.constant 0 : index
      %121 = vector.load %arg15[%c0_62, %c0_63, %c0_64] : memref<4x8x8xf32, #tpu.memory_space<vmem>>, vector<1x8x8xf32>
      %122 = vector.shape_cast %121 : vector<1x8x8xf32> to vector<8x8xf32>
      %123 = vector.shape_cast %120 : vector<8x8xf32> to vector<1x8x8xf32>
      tpu.vector_store %arg15[%c0_62, %c0_63, %c0_64], %123 {strides = array<i32>} : memref<4x8x8xf32, #tpu.memory_space<vmem>>, vector<1x8x8xf32>,
      %124 = vector.extract_strided_slice %113 {offsets = [0, 64], sizes = [8, 8], strides = [1, 1]} : vector<8x96xf32> to vector<8x8xf32>
      %c0_65 = arith.constant 0 : index
      %c0_66 = arith.constant 0 : index
      %c0_67 = arith.constant 0 : index
      %125 = vector.load %arg16[%c0_65, %c0_66, %c0_67] : memref<4x8x8xf32, #tpu.memory_space<vmem>>, vector<1x8x8xf32>
      %126 = vector.shape_cast %125 : vector<1x8x8xf32> to vector<8x8xf32>
      %127 = vector.shape_cast %124 : vector<8x8xf32> to vector<1x8x8xf32>
      tpu.vector_store %arg16[%c0_65, %c0_66, %c0_67], %127 {strides = array<i32>} : memref<4x8x8xf32, #tpu.memory_space<vmem>>, vector<1x8x8xf32>,
      %128 = vector.extract_strided_slice %113 {offsets = [0, 8], sizes = [8, 8], strides = [1, 1]} : vector<8x96xf32> to vector<8x8xf32>
      %cst_68 = arith.constant 0.353553385 : f32
      %129 = vector.broadcast %cst_68 : f32 to vector<8x8xf32>
      %130 = arith.mulf %128, %129 : vector<8x8xf32>
      %c1 = arith.constant 1 : index
      %c0_69 = arith.constant 0 : index
      %c0_70 = arith.constant 0 : index
      %131 = vector.load %arg14[%c1, %c0_69, %c0_70] : memref<4x8x8xf32, #tpu.memory_space<vmem>>, vector<1x8x8xf32>
      %132 = vector.shape_cast %131 : vector<1x8x8xf32> to vector<8x8xf32>
      %133 = vector.shape_cast %130 : vector<8x8xf32> to vector<1x8x8xf32>
      tpu.vector_store %arg14[%c1, %c0_69, %c0_70], %133 {strides = array<i32>} : memref<4x8x8xf32, #tpu.memory_space<vmem>>, vector<1x8x8xf32>,
      %134 = vector.extract_strided_slice %113 {offsets = [0, 40], sizes = [8, 8], strides = [1, 1]} : vector<8x96xf32> to vector<8x8xf32>
      %c1_71 = arith.constant 1 : index
      %c0_72 = arith.constant 0 : index
      %c0_73 = arith.constant 0 : index
      %135 = vector.load %arg15[%c1_71, %c0_72, %c0_73] : memref<4x8x8xf32, #tpu.memory_space<vmem>>, vector<1x8x8xf32>
      %136 = vector.shape_cast %135 : vector<1x8x8xf32> to vector<8x8xf32>
      %137 = vector.shape_cast %134 : vector<8x8xf32> to vector<1x8x8xf32>
      tpu.vector_store %arg15[%c1_71, %c0_72, %c0_73], %137 {strides = array<i32>} : memref<4x8x8xf32, #tpu.memory_space<vmem>>, vector<1x8x8xf32>,
      %138 = vector.extract_strided_slice %113 {offsets = [0, 72], sizes = [8, 8], strides = [1, 1]} : vector<8x96xf32> to vector<8x8xf32>
      %c1_74 = arith.constant 1 : index
      %c0_75 = arith.constant 0 : index
      %c0_76 = arith.constant 0 : index
      %139 = vector.load %arg16[%c1_74, %c0_75, %c0_76] : memref<4x8x8xf32, #tpu.memory_space<vmem>>, vector<1x8x8xf32>
      %140 = vector.shape_cast %139 : vector<1x8x8xf32> to vector<8x8xf32>
      %141 = vector.shape_cast %138 : vector<8x8xf32> to vector<1x8x8xf32>
      tpu.vector_store %arg16[%c1_74, %c0_75, %c0_76], %141 {strides = array<i32>} : memref<4x8x8xf32, #tpu.memory_space<vmem>>, vector<1x8x8xf32>,
      %142 = vector.extract_strided_slice %113 {offsets = [0, 16], sizes = [8, 8], strides = [1, 1]} : vector<8x96xf32> to vector<8x8xf32>
      %cst_77 = arith.constant 0.353553385 : f32
      %143 = vector.broadcast %cst_77 : f32 to vector<8x8xf32>
      %144 = arith.mulf %142, %143 : vector<8x8xf32>
      %c2 = arith.constant 2 : index
      %c0_78 = arith.constant 0 : index
      %c0_79 = arith.constant 0 : index
      %145 = vector.load %arg14[%c2, %c0_78, %c0_79] : memref<4x8x8xf32, #tpu.memory_space<vmem>>, vector<1x8x8xf32>
      %146 = vector.shape_cast %145 : vector<1x8x8xf32> to vector<8x8xf32>
      %147 = vector.shape_cast %144 : vector<8x8xf32> to vector<1x8x8xf32>
      tpu.vector_store %arg14[%c2, %c0_78, %c0_79], %147 {strides = array<i32>} : memref<4x8x8xf32, #tpu.memory_space<vmem>>, vector<1x8x8xf32>,
      %148 = vector.extract_strided_slice %113 {offsets = [0, 48], sizes = [8, 8], strides = [1, 1]} : vector<8x96xf32> to vector<8x8xf32>
      %c2_80 = arith.constant 2 : index
      %c0_81 = arith.constant 0 : index
      %c0_82 = arith.constant 0 : index
      %149 = vector.load %arg15[%c2_80, %c0_81, %c0_82] : memref<4x8x8xf32, #tpu.memory_space<vmem>>, vector<1x8x8xf32>
      %150 = vector.shape_cast %149 : vector<1x8x8xf32> to vector<8x8xf32>
      %151 = vector.shape_cast %148 : vector<8x8xf32> to vector<1x8x8xf32>
      tpu.vector_store %arg15[%c2_80, %c0_81, %c0_82], %151 {strides = array<i32>} : memref<4x8x8xf32, #tpu.memory_space<vmem>>, vector<1x8x8xf32>,
      %152 = vector.extract_strided_slice %113 {offsets = [0, 80], sizes = [8, 8], strides = [1, 1]} : vector<8x96xf32> to vector<8x8xf32>
      %c2_83 = arith.constant 2 : index
      %c0_84 = arith.constant 0 : index
      %c0_85 = arith.constant 0 : index
      %153 = vector.load %arg16[%c2_83, %c0_84, %c0_85] : memref<4x8x8xf32, #tpu.memory_space<vmem>>, vector<1x8x8xf32>
      %154 = vector.shape_cast %153 : vector<1x8x8xf32> to vector<8x8xf32>
      %155 = vector.shape_cast %152 : vector<8x8xf32> to vector<1x8x8xf32>
      tpu.vector_store %arg16[%c2_83, %c0_84, %c0_85], %155 {strides = array<i32>} : memref<4x8x8xf32, #tpu.memory_space<vmem>>, vector<1x8x8xf32>,
      %156 = vector.extract_strided_slice %113 {offsets = [0, 24], sizes = [8, 8], strides = [1, 1]} : vector<8x96xf32> to vector<8x8xf32>
      %cst_86 = arith.constant 0.353553385 : f32
      %157 = vector.broadcast %cst_86 : f32 to vector<8x8xf32>
      %158 = arith.mulf %156, %157 : vector<8x8xf32>
      %c3 = arith.constant 3 : index
      %c0_87 = arith.constant 0 : index
      %c0_88 = arith.constant 0 : index
      %159 = vector.load %arg14[%c3, %c0_87, %c0_88] : memref<4x8x8xf32, #tpu.memory_space<vmem>>, vector<1x8x8xf32>
      %160 = vector.shape_cast %159 : vector<1x8x8xf32> to vector<8x8xf32>
      %161 = vector.shape_cast %158 : vector<8x8xf32> to vector<1x8x8xf32>
      tpu.vector_store %arg14[%c3, %c0_87, %c0_88], %161 {strides = array<i32>} : memref<4x8x8xf32, #tpu.memory_space<vmem>>, vector<1x8x8xf32>,
      %162 = vector.extract_strided_slice %113 {offsets = [0, 56], sizes = [8, 8], strides = [1, 1]} : vector<8x96xf32> to vector<8x8xf32>
      %c3_89 = arith.constant 3 : index
      %c0_90 = arith.constant 0 : index
      %c0_91 = arith.constant 0 : index
      %163 = vector.load %arg15[%c3_89, %c0_90, %c0_91] : memref<4x8x8xf32, #tpu.memory_space<vmem>>, vector<1x8x8xf32>
      %164 = vector.shape_cast %163 : vector<1x8x8xf32> to vector<8x8xf32>
      %165 = vector.shape_cast %162 : vector<8x8xf32> to vector<1x8x8xf32>
      tpu.vector_store %arg15[%c3_89, %c0_90, %c0_91], %165 {strides = array<i32>} : memref<4x8x8xf32, #tpu.memory_space<vmem>>, vector<1x8x8xf32>,
      %166 = vector.extract_strided_slice %113 {offsets = [0, 88], sizes = [8, 8], strides = [1, 1]} : vector<8x96xf32> to vector<8x8xf32>
      %c3_92 = arith.constant 3 : index
      %c0_93 = arith.constant 0 : index
      %c0_94 = arith.constant 0 : index
      %167 = vector.load %arg16[%c3_92, %c0_93, %c0_94] : memref<4x8x8xf32, #tpu.memory_space<vmem>>, vector<1x8x8xf32>
      %168 = vector.shape_cast %167 : vector<1x8x8xf32> to vector<8x8xf32>
      %169 = vector.shape_cast %166 : vector<8x8xf32> to vector<1x8x8xf32>
      tpu.vector_store %arg16[%c3_92, %c0_93, %c0_94], %169 {strides = array<i32>} : memref<4x8x8xf32, #tpu.memory_space<vmem>>, vector<1x8x8xf32>,
    } else {
    }
    %c8_i32 = arith.constant 8 : i32
    %3 = arith.muli %arg1, %c8_i32 : i32
    %4 = tpu.assume_multiple %3, 8 : i32
    %c0 = arith.constant 0 : index
    %5 = arith.index_cast %4 : i32 to index
    %c0_1 = arith.constant 0 : index
    %6 = vector.load %arg2[%c0, %5, %c0_1] : memref<1x8x32xf32, #tpu.memory_space<vmem>>, vector<1x8x32xf32>
    %7 = vector.shape_cast %6 : vector<1x8x32xf32> to vector<8x32xf32>
    %c0_2 = arith.constant 0 : index
    %8 = arith.index_cast %4 : i32 to index
    %c0_3 = arith.constant 0 : index
    %9 = vector.load %arg14[%c0_2, %8, %c0_3] : memref<4x8x8xf32, #tpu.memory_space<vmem>>, vector<4x8x8xf32>
    %c0_4 = arith.constant 0 : index
    %c0_5 = arith.constant 0 : index
    %c0_6 = arith.constant 0 : index
    %10 = vector.load %arg15[%c0_4, %c0_5, %c0_6] : memref<4x8x8xf32, #tpu.memory_space<vmem>>, vector<4x8x8xf32>
    %c0_7 = arith.constant 0 : index
    %c0_8 = arith.constant 0 : index
    %c0_9 = arith.constant 0 : index
    %11 = vector.load %arg16[%c0_7, %c0_8, %c0_9] : memref<4x8x8xf32, #tpu.memory_space<vmem>>, vector<4x8x8xf32>
    "tpu.trace_start"() <{level = 10 : i32, message = "htd,hcd->htc"}> : () -> ()
    %cst = arith.constant dense<0.000000e+00> : vector<4x8x8xf32>
    %12 = tpu.matmul %9, %10, %cst {dimension_numbers = #tpu.dot_dimension_numbers<[2], [2], [1], [1], [0, 0, 0, 1, 1, 1], [0], [0]>} : vector<4x8x8xf32>, vector<4x8x8xf32>, vector<4x8x8xf32> -> vector<4x8x8xf32>
    "tpu.trace_stop"() : () -> ()
    %cst_10 = arith.constant dense<0xFF800000> : vector<4x8xf32>
    %13 = vector.multi_reduction <maximumf>, %12, %cst_10 [2] : vector<4x8x8xf32> to vector<4x8xf32>
    %14 = vector.shape_cast %13 : vector<4x8xf32> to vector<4x8x1xf32>
    %15 = vector.broadcast %14 : vector<4x8x1xf32> to vector<4x8x8xf32>
    %16 = arith.subf %12, %15 : vector<4x8x8xf32>
    %17 = math.exp %16 : vector<4x8x8xf32>
    %cst_11 = arith.constant dense<0.000000e+00> : vector<4x8xf32>
    %18 = vector.multi_reduction <add>, %17, %cst_11 [2] : vector<4x8x8xf32> to vector<4x8xf32>
    %19 = vector.shape_cast %18 : vector<4x8xf32> to vector<4x8x1xf32>
    %20 = tpu.reciprocal %19 : vector<4x8x1xf32> -> vector<4x8x1xf32>
    %21 = vector.broadcast %20 : vector<4x8x1xf32> to vector<4x8x8xf32>
    %22 = arith.mulf %17, %21 : vector<4x8x8xf32>
    "tpu.trace_start"() <{level = 10 : i32, message = "htc,hcd->htd"}> : () -> ()
    %cst_12 = arith.constant dense<0.000000e+00> : vector<4x8x8xf32>
    %23 = tpu.matmul %22, %11, %cst_12 {dimension_numbers = #tpu.dot_dimension_numbers<[2], [1], [1], [2], [0, 0, 0, 1, 1, 2], [0], [0]>} : vector<4x8x8xf32>, vector<4x8x8xf32>, vector<4x8x8xf32> -> vector<4x8x8xf32>
    "tpu.trace_stop"() : () -> ()
    %c0_13 = arith.constant 0 : index
    %c0_14 = arith.constant 0 : index
    %c0_15 = arith.constant 0 : index
    %24 = vector.load %arg4[%c0_13, %c0_14, %c0_15] : memref<4x8x32xf32, #tpu.memory_space<vmem>>, vector<4x8x32xf32>
    "tpu.trace_start"() <{level = 10 : i32, message = "htd,hde->hte"}> : () -> ()
    %cst_16 = arith.constant dense<0.000000e+00> : vector<4x8x32xf32>
    %25 = tpu.matmul %23, %24, %cst_16 {dimension_numbers = #tpu.dot_dimension_numbers<[2], [1], [1], [2], [0, 0, 0, 1, 1, 2], [0], [0]>} : vector<4x8x8xf32>, vector<4x8x32xf32>, vector<4x8x32xf32> -> vector<4x8x32xf32>
    "tpu.trace_stop"() : () -> ()
    %cst_17 = arith.constant dense<0.000000e+00> : vector<8x32xf32>
    %26 = vector.multi_reduction <add>, %25, %cst_17 [0] : vector<4x8x32xf32> to vector<8x32xf32>
    %27 = arith.addf %7, %26 : vector<8x32xf32>
    %c0_18 = arith.constant 0 : index
    %c0_19 = arith.constant 0 : index
    %28 = vector.load %arg11[%c0_18, %c0_19] : memref<1x32xf32, #tpu.memory_space<vmem>>, vector<1x32xf32>
    %29 = vector.shape_cast %28 : vector<1x32xf32> to vector<32xf32>
    %c0_20 = arith.constant 0 : index
    %c0_21 = arith.constant 0 : index
    %30 = vector.load %arg12[%c0_20, %c0_21] : memref<1x32xf32, #tpu.memory_space<vmem>>, vector<1x32xf32>
    %31 = vector.shape_cast %30 : vector<1x32xf32> to vector<32xf32>
    %cst_22 = arith.constant dense<0.000000e+00> : vector<8xf32>
    %32 = vector.multi_reduction <add>, %27, %cst_22 [1] : vector<8x32xf32> to vector<8xf32>
    %33 = vector.shape_cast %32 : vector<8xf32> to vector<8x1xf32>
    %cst_23 = arith.constant 3.200000e+01 : f32
    %34 = vector.broadcast %cst_23 : f32 to vector<8x1xf32>
    %35 = arith.divf %33, %34 : vector<8x1xf32>
    %36 = vector.broadcast %35 : vector<8x1xf32> to vector<8x32xf32>
    %37 = arith.subf %27, %36 : vector<8x32xf32>
    %38 = arith.mulf %37, %37 : vector<8x32xf32>
    %cst_24 = arith.constant dense<0.000000e+00> : vector<8xf32>
    %39 = vector.multi_reduction <add>, %38, %cst_24 [1] : vector<8x32xf32> to vector<8xf32>
    %40 = vector.shape_cast %39 : vector<8xf32> to vector<8x1xf32>
    %cst_25 = arith.constant 3.200000e+01 : f32
    %41 = vector.broadcast %cst_25 : f32 to vector<8x1xf32>
    %42 = arith.divf %40, %41 : vector<8x1xf32>
    %43 = vector.broadcast %35 : vector<8x1xf32> to vector<8x32xf32>
    %44 = arith.subf %27, %43 : vector<8x32xf32>
    %cst_26 = arith.constant 9.99999974E-6 : f32
    %45 = vector.broadcast %cst_26 : f32 to vector<8x1xf32>
    %46 = arith.addf %42, %45 : vector<8x1xf32>
    %47 = math.rsqrt %46 : vector<8x1xf32>
    %48 = vector.broadcast %47 : vector<8x1xf32> to vector<8x32xf32>
    %49 = arith.mulf %44, %48 : vector<8x32xf32>
    %50 = vector.shape_cast %29 : vector<32xf32> to vector<1x32xf32>
    %51 = vector.broadcast %50 : vector<1x32xf32> to vector<8x32xf32>
    %52 = arith.mulf %49, %51 : vector<8x32xf32>
    %53 = vector.shape_cast %31 : vector<32xf32> to vector<1x32xf32>
    %54 = vector.broadcast %53 : vector<1x32xf32> to vector<8x32xf32>
    %55 = arith.addf %52, %54 : vector<8x32xf32>
    %c0_27 = arith.constant 0 : index
    %c0_28 = arith.constant 0 : index
    %56 = vector.load %arg5[%c0_27, %c0_28] : memref<32x128xf32, #tpu.memory_space<vmem>>, vector<32x128xf32>
    %cst_29 = arith.constant dense<0.000000e+00> : vector<8x128xf32>
    %57 = tpu.matmul %55, %56, %cst_29 {dimension_numbers = #tpu.dot_dimension_numbers<[1], [0], [0], [1], [0, 0, 1, 1], [], []>} : vector<8x32xf32>, vector<32x128xf32>, vector<8x128xf32> -> vector<8x128xf32>
    %c0_30 = arith.constant 0 : index
    %c0_31 = arith.constant 0 : index
    %58 = vector.load %arg6[%c0_30, %c0_31] : memref<1x128xf32, #tpu.memory_space<vmem>>, vector<1x128xf32>
    %59 = vector.shape_cast %58 : vector<1x128xf32> to vector<128xf32>
    %60 = vector.shape_cast %59 : vector<128xf32> to vector<1x128xf32>
    %61 = vector.broadcast %60 : vector<1x128xf32> to vector<8x128xf32>
    %62 = arith.addf %57, %61 : vector<8x128xf32>
    %cst_32 = arith.constant 5.000000e-01 : f32
    %63 = vector.broadcast %cst_32 : f32 to vector<8x128xf32>
    %64 = arith.mulf %63, %62 : vector<8x128xf32>
    %cst_33 = arith.constant 0.707106769 : f32
    %65 = vector.broadcast %cst_33 : f32 to vector<8x128xf32>
    %66 = arith.mulf %62, %65 : vector<8x128xf32>
    %67 = math.erf %66 : vector<8x128xf32>
    %cst_34 = arith.constant 1.000000e+00 : f32
    %68 = vector.broadcast %cst_34 : f32 to vector<8x128xf32>
    %69 = arith.addf %68, %67 : vector<8x128xf32>
    %70 = arith.mulf %64, %69 : vector<8x128xf32>
    %c0_35 = arith.constant 0 : index
    %c0_36 = arith.constant 0 : index
    %71 = vector.load %arg7[%c0_35, %c0_36] : memref<128x32xf32, #tpu.memory_space<vmem>>, vector<128x32xf32>
    %cst_37 = arith.constant dense<0.000000e+00> : vector<8x32xf32>
    %72 = tpu.matmul %70, %71, %cst_37 {dimension_numbers = #tpu.dot_dimension_numbers<[1], [0], [0], [1], [0, 0, 1, 1], [], []>} : vector<8x128xf32>, vector<128x32xf32>, vector<8x32xf32> -> vector<8x32xf32>
    %c0_38 = arith.constant 0 : index
    %c0_39 = arith.constant 0 : index
    %73 = vector.load %arg8[%c0_38, %c0_39] : memref<1x32xf32, #tpu.memory_space<vmem>>, vector<1x32xf32>
    %74 = vector.shape_cast %73 : vector<1x32xf32> to vector<32xf32>
    %75 = vector.shape_cast %74 : vector<32xf32> to vector<1x32xf32>
    %76 = vector.broadcast %75 : vector<1x32xf32> to vector<8x32xf32>
    %77 = arith.addf %72, %76 : vector<8x32xf32>
    %78 = arith.addf %27, %77 : vector<8x32xf32>
    %c0_40 = arith.constant 0 : index
    %c0_41 = arith.constant 0 : index
    %c0_42 = arith.constant 0 : index
    %79 = vector.load %arg13[%c0_40, %c0_41, %c0_42] : memref<1x8x32xf32, #tpu.memory_space<vmem>>, vector<1x8x32xf32>
    %80 = vector.shape_cast %79 : vector<1x8x32xf32> to vector<8x32xf32>
    %81 = vector.shape_cast %78 : vector<8x32xf32> to vector<1x8x32xf32>
    tpu.vector_store %arg13[%c0_40, %c0_41, %c0_42], %81 {strides = array<i32>} : memref<1x8x32xf32, #tpu.memory_space<vmem>>, vector<1x8x32xf32>,
    return
  }
  func.func @transform_0(%arg0: i32, %arg1: i32) -> (i32, i32, i32) {
    %c0_i32 = arith.constant 0 : i32
    %c0_i32_0 = arith.constant 0 : i32
    %c0_i32_1 = arith.constant 0 : i32
    return %arg0, %c0_i32, %c0_i32_0 : i32, i32, i32
  }
  func.func @transform_1(%arg0: i32, %arg1: i32) -> (i32, i32) {
    %c0_i32 = arith.constant 0 : i32
    %c0_i32_0 = arith.constant 0 : i32
    %c0_i32_1 = arith.constant 0 : i32
    return %c0_i32, %c0_i32_0 : i32, i32
  }
  func.func @transform_2(%arg0: i32, %arg1: i32) -> (i32, i32, i32) {
    %c0_i32 = arith.constant 0 : i32
    %c0_i32_0 = arith.constant 0 : i32
    %c0_i32_1 = arith.constant 0 : i32
    %c0_i32_2 = arith.constant 0 : i32
    return %c0_i32, %c0_i32_0, %c0_i32_1 : i32, i32, i32
  }
  func.func @transform_3(%arg0: i32, %arg1: i32) -> (i32, i32) {
    %c0_i32 = arith.constant 0 : i32
    %c0_i32_0 = arith.constant 0 : i32
    %c0_i32_1 = arith.constant 0 : i32
    return %c0_i32, %c0_i32_0 : i32, i32
  }
  func.func @transform_4(%arg0: i32, %arg1: i32) -> (i32, i32) {
    %c0_i32 = arith.constant 0 : i32
    %c0_i32_0 = arith.constant 0 : i32
    %c0_i32_1 = arith.constant 0 : i32
    return %c0_i32, %c0_i32_0 : i32, i32
  }
  func.func @transform_5(%arg0: i32, %arg1: i32) -> (i32, i32) {
    %c0_i32 = arith.constant 0 : i32
    %c0_i32_0 = arith.constant 0 : i32
    %c0_i32_1 = arith.constant 0 : i32
    return %c0_i32, %c0_i32_0 : i32, i32
  }
  func.func @transform_6(%arg0: i32, %arg1: i32) -> (i32, i32) {
    %c0_i32 = arith.constant 0 : i32
    %c0_i32_0 = arith.constant 0 : i32
    %c0_i32_1 = arith.constant 0 : i32
    return %c0_i32, %c0_i32_0 : i32, i32
  }
  func.func @transform_7(%arg0: i32, %arg1: i32) -> (i32, i32) {
    %c0_i32 = arith.constant 0 : i32
    %c0_i32_0 = arith.constant 0 : i32
    %c0_i32_1 = arith.constant 0 : i32
    return %c0_i32, %c0_i32_0 : i32, i32
  }
  func.func @transform_8(%arg0: i32, %arg1: i32) -> (i32, i32) {
    %c0_i32 = arith.constant 0 : i32
    %c0_i32_0 = arith.constant 0 : i32
    %c0_i32_1 = arith.constant 0 : i32
    return %c0_i32, %c0_i32_0 : i32, i32
  }
  func.func @transform_9(%arg0: i32, %arg1: i32) -> (i32, i32) {
    %c0_i32 = arith.constant 0 : i32
    %c0_i32_0 = arith.constant 0 : i32
    %c0_i32_1 = arith.constant 0 : i32
    return %c0_i32, %c0_i32_0 : i32, i32
  }
  func.func @transform_10(%arg0: i32, %arg1: i32) -> (i32, i32) {
    %c0_i32 = arith.constant 0 : i32
    %c0_i32_0 = arith.constant 0 : i32
    %c0_i32_1 = arith.constant 0 : i32
    return %c0_i32, %c0_i32_0 : i32, i32
  }
  func.func @transform_11(%arg0: i32, %arg1: i32) -> (i32, i32, i32) {
    %c0_i32 = arith.constant 0 : i32
    %c0_i32_0 = arith.constant 0 : i32
    return %arg0, %arg1, %c0_i32 : i32, i32, i32
  }
}

</mosaic_0001>

<llo_original>
// kernel: tpu_custom_call.1
$region0: #{tpu_custom_call.1}
  #allocation0 [shape = 'u32[]', space=smem, size = 0x4, offset = 0x4, fixed_abs, tag = 'smem constant byte address 0x4 - core index']
  #allocation1 [shape = 'u32[72,128]{1,0:T(1,128)}', space=vmem, size = 0x9000, scoped, tag = 'internal scratch']
  #allocation2 [shape = 'f32[4,8,8]{2,1,0:T(8,128)}', space=vmem, size = 0x4000, scoped, tag = 'scratch operand']
  #allocation3 [shape = 'f32[4,8,8]{2,1,0:T(8,128)}', space=vmem, size = 0x4000, scoped, tag = 'scratch operand']
  #allocation4 [shape = 'f32[4,8,8]{2,1,0:T(8,128)}', space=vmem, size = 0x4000, scoped, tag = 'scratch operand']
  %s0 = inlined_call_operand.vmem [shape: f32[2,8,32], index: 0, kind: input, shape index: {}]
  %s1 = inlined_call_operand.vmem [shape: f32[32,96], index: 1, kind: input, shape index: {}]
  %s2 = inlined_call_operand.vmem [shape: f32[4,8,32], index: 2, kind: input, shape index: {}]
  %s3 = inlined_call_operand.vmem [shape: f32[32,128], index: 3, kind: input, shape index: {}]
  %s4 = inlined_call_operand.vmem [shape: f32[1,128], index: 4, kind: input, shape index: {}]
  %s5 = inlined_call_operand.vmem [shape: f32[128,32], index: 5, kind: input, shape index: {}]
  %s6 = inlined_call_operand.vmem [shape: f32[1,32], index: 6, kind: input, shape index: {}]
  %s7 = inlined_call_operand.vmem [shape: f32[1,32], index: 7, kind: input, shape index: {}]
  %s8 = inlined_call_operand.vmem [shape: f32[1,32], index: 8, kind: input, shape index: {}]
  %s9 = inlined_call_operand.vmem [shape: f32[1,32], index: 9, kind: input, shape index: {}]
  %s10 = inlined_call_operand.vmem [shape: f32[1,32], index: 10, kind: input, shape index: {}]
  %s11 = inlined_call_operand.hbm [shape: f32[2,8,32], index: 11, kind: output, shape index: {}]
  %s12 = sld [smem:[#allocation0]]
  $region81: #{tpu_custom_call.1} parent=0
    _
  %s14 = ssub.s32 1, %s12
  %s15 = scalar_select 0, %s14, %s12
  $region1: #{tpu_custom_call.1} parent=0
    #allocation5 [shape = 'u8[8192]{0}', space=vmem, size = 0x2000, scoped, tag = 'output window, operand 0']
    #allocation6 [shape = 's32[2]{0}', space=sflag, size = 0x8, scoped, tag = 'scoped memory for tpu_custom_call.1']
    %16 = vsyncpa [#allocation6], 0
    %s17 = scalar_lea.sflag [#allocation6], 1
    %18 = vsyncpa %s17, 0
    loop: start=0, step=1, limit=4
    $region2: #{tpu_custom_call.1} parent=1 // loop_pre_header
      _
    $region3: #{tpu_custom_call.1} parent=1 // loop_header
      %s20 = sphi 0, %s24
      %p21 = scmp.ge.s32.totalorder %s20, 4
      %s27 = sphi 0, %s39
      %s28 = sphi 0, %s35
      %s29 = sphi 0, %s27
      %s30 = sphi 0, %s28
      %s31 = sphi 0, %s29
      %s32 = sphi 0, %s30
      %s42 = sphi 0, %s44
      %s45 = sphi 0, %s42
      %s46 = sphi 0, %s45
      %s62 = sphi 0, %s46
      %s66 = sphi 0, %s66
      %s68 = sphi 0, %s66
      %s69 = sphi 0, %s68
      %s83 = sphi 0, %s69
      %s87 = sphi 0, %s87
      %s89 = sphi 0, %s87
      %s90 = sphi 0, %s89
      %s104 = sphi 0, %s90
      %s108 = sphi 0, %s108
      %s110 = sphi 0, %s108
      %s111 = sphi 0, %s110
      %s125 = sphi 0, %s111
      %s129 = sphi 0, %s129
      %s131 = sphi 0, %s129
      %s132 = sphi 0, %s131
      %s146 = sphi 0, %s132
      %s150 = sphi 0, %s150
      %s152 = sphi 0, %s150
      %s153 = sphi 0, %s152
      %s167 = sphi 0, %s153
      %s171 = sphi 0, %s171
      %s173 = sphi 0, %s171
      %s174 = sphi 0, %s173
      %s188 = sphi 0, %s174
      %s192 = sphi 0, %s192
      %s194 = sphi 0, %s192
      %s195 = sphi 0, %s194
      %s209 = sphi 0, %s195
      %s213 = sphi 0, %s213
      %s215 = sphi 0, %s213
      %s216 = sphi 0, %s215
      %s230 = sphi 0, %s216
      %s234 = sphi 0, %s234
      %s236 = sphi 0, %s234
      %s237 = sphi 0, %s236
      %s251 = sphi 0, %s237
      %s255 = sphi 0, %s255
      %s257 = sphi 0, %s255
      %s258 = sphi 0, %s257
      %s272 = sphi 0, %s258
      %s280 = sphi 0, %s282
      %s283 = sphi 0, %s280
      %s284 = sphi 0, %s283
      %s300 = sphi 0, %s284
    $region4: #{tpu_custom_call.1} parent=1 // loop_header_branch
      %23 = sbr.rel (%p21) target = $region8
    $region5: #{tpu_custom_call.1} parent=1 // loop_body
      %s25 = ssub.s32 %s20, 1
      %s26 = ssub.s32 %s20, 2
      %s33 = sadd.s32 1, %s28
      %p34 = scmp.ge.s32.totalorder %s33, 1
      %s35 = scalar_select %p34, 0, %s33
      %s36 = sadd.s32 1, %s27
      %s37 = scalar_select %p34, %s36, %s27
      %p38 = scmp.ge.s32.totalorder %s37, 2
      %s39 = scalar_select %p38, 0, %s37
      %s40 = ssub.s32 %s27, %s39
      %p41 = scmp.eq.s32.totalorder %s40, 0
      %s43 = sadd.s32 %s42, 1
      %s44 = scalar_select %p41, %s42, %s43
      %p47 = pneg %p41
      %p48 = scmp.eq.s32.totalorder %s20, 1
      %p49 = por %p47, %p48
      %p50 = scmp.ne.s32.totalorder %s42, %s45
      %p51 = scmp.eq.s32.totalorder %s20, 0
      %p52 = por %p50, %p51
      %p53 = scmp.ne.s32.totalorder %s42, %s45
      %p54 = scmp.eq.s32.totalorder %s25, 1
      %p55 = por %p53, %p54
      %p56 = scmp.ne.s32.totalorder %s45, %s46
      %p57 = scmp.eq.s32.totalorder %s25, 0
      %p58 = por %p56, %p57
      %p59 = scmp.ne.s32.totalorder %s45, %s46
      %p60 = scmp.eq.s32.totalorder %s26, 1
      %p61 = por %p59, %p60
      %p63 = scmp.ne.s32.totalorder %s46, %s62
      %p64 = scmp.eq.s32.totalorder %s26, 0
      %p65 = por %p63, %p64
      %s67 = sadd.s32 %s66, 1
      %p70 = scmp.eq.s32.totalorder %s20, 1
      %p71 = scmp.ne.s32.totalorder %s66, %s68
      %p72 = scmp.eq.s32.totalorder %s20, 0
      %p73 = por %p71, %p72
      %p74 = scmp.ne.s32.totalorder %s66, %s68
      %p75 = scmp.eq.s32.totalorder %s25, 1
      %p76 = por %p74, %p75
      %p77 = scmp.ne.s32.totalorder %s68, %s69
      %p78 = scmp.eq.s32.totalorder %s25, 0
      %p79 = por %p77, %p78
      %p80 = scmp.ne.s32.totalorder %s68, %s69
      %p81 = scmp.eq.s32.totalorder %s26, 1
      %p82 = por %p80, %p81
      %p84 = scmp.ne.s32.totalorder %s69, %s83
      %p85 = scmp.eq.s32.totalorder %s26, 0
      %p86 = por %p84, %p85
      %s88 = sadd.s32 %s87, 1
      %p91 = scmp.eq.s32.totalorder %s20, 1
      %p92 = scmp.ne.s32.totalorder %s87, %s89
      %p93 = scmp.eq.s32.totalorder %s20, 0
      %p94 = por %p92, %p93
      %p95 = scmp.ne.s32.totalorder %s87, %s89
      %p96 = scmp.eq.s32.totalorder %s25, 1
      %p97 = por %p95, %p96
      %p98 = scmp.ne.s32.totalorder %s89, %s90
      %p99 = scmp.eq.s32.totalorder %s25, 0
      %p100 = por %p98, %p99
      %p101 = scmp.ne.s32.totalorder %s89, %s90
      %p102 = scmp.eq.s32.totalorder %s26, 1
      %p103 = por %p101, %p102
      %p105 = scmp.ne.s32.totalorder %s90, %s104
      %p106 = scmp.eq.s32.totalorder %s26, 0
      %p107 = por %p105, %p106
      %s109 = sadd.s32 %s108, 1
      %p112 = scmp.eq.s32.totalorder %s20, 1
      %p113 = scmp.ne.s32.totalorder %s108, %s110
      %p114 = scmp.eq.s32.totalorder %s20, 0
      %p115 = por %p113, %p114
      %p116 = scmp.ne.s32.totalorder %s108, %s110
      %p117 = scmp.eq.s32.totalorder %s25, 1
      %p118 = por %p116, %p117
      %p119 = scmp.ne.s32.totalorder %s110, %s111
      %p120 = scmp.eq.s32.totalorder %s25, 0
      %p121 = por %p119, %p120
      %p122 = scmp.ne.s32.totalorder %s110, %s111
      %p123 = scmp.eq.s32.totalorder %s26, 1
      %p124 = por %p122, %p123
      %p126 = scmp.ne.s32.totalorder %s111, %s125
      %p127 = scmp.eq.s32.totalorder %s26, 0
      %p128 = por %p126, %p127
      %s130 = sadd.s32 %s129, 1
      %p133 = scmp.eq.s32.totalorder %s20, 1
      %p134 = scmp.ne.s32.totalorder %s129, %s131
      %p135 = scmp.eq.s32.totalorder %s20, 0
      %p136 = por %p134, %p135
      %p137 = scmp.ne.s32.totalorder %s129, %s131
      %p138 = scmp.eq.s32.totalorder %s25, 1
      %p139 = por %p137, %p138
      %p140 = scmp.ne.s32.totalorder %s131, %s132
      %p141 = scmp.eq.s32.totalorder %s25, 0
      %p142 = por %p140, %p141
      %p143 = scmp.ne.s32.totalorder %s131, %s132
      %p144 = scmp.eq.s32.totalorder %s26, 1
      %p145 = por %p143, %p144
      %p147 = scmp.ne.s32.totalorder %s132, %s146
      %p148 = scmp.eq.s32.totalorder %s26, 0
      %p149 = por %p147, %p148
      %s151 = sadd.s32 %s150, 1
      %p154 = scmp.eq.s32.totalorder %s20, 1
      %p155 = scmp.ne.s32.totalorder %s150, %s152
      %p156 = scmp.eq.s32.totalorder %s20, 0
      %p157 = por %p155, %p156
      %p158 = scmp.ne.s32.totalorder %s150, %s152
      %p159 = scmp.eq.s32.totalorder %s25, 1
      %p160 = por %p158, %p159
      %p161 = scmp.ne.s32.totalorder %s152, %s153
      %p162 = scmp.eq.s32.totalorder %s25, 0
      %p163 = por %p161, %p162
      %p164 = scmp.ne.s32.totalorder %s152, %s153
      %p165 = scmp.eq.s32.totalorder %s26, 1
      %p166 = por %p164, %p165
      %p168 = scmp.ne.s32.totalorder %s153, %s167
      %p169 = scmp.eq.s32.totalorder %s26, 0
      %p170 = por %p168, %p169
      %s172 = sadd.s32 %s171, 1
      %p175 = scmp.eq.s32.totalorder %s20, 1
      %p176 = scmp.ne.s32.totalorder %s171, %s173
      %p177 = scmp.eq.s32.totalorder %s20, 0
      %p178 = por %p176, %p177
      %p179 = scmp.ne.s32.totalorder %s171, %s173
      %p180 = scmp.eq.s32.totalorder %s25, 1
      %p181 = por %p179, %p180
      %p182 = scmp.ne.s32.totalorder %s173, %s174
      %p183 = scmp.eq.s32.totalorder %s25, 0
      %p184 = por %p182, %p183
      %p185 = scmp.ne.s32.totalorder %s173, %s174
      %p186 = scmp.eq.s32.totalorder %s26, 1
      %p187 = por %p185, %p186
      %p189 = scmp.ne.s32.totalorder %s174, %s188
      %p190 = scmp.eq.s32.totalorder %s26, 0
      %p191 = por %p189, %p190
      %s193 = sadd.s32 %s192, 1
      %p196 = scmp.eq.s32.totalorder %s20, 1
      %p197 = scmp.ne.s32.totalorder %s192, %s194
      %p198 = scmp.eq.s32.totalorder %s20, 0
      %p199 = por %p197, %p198
      %p200 = scmp.ne.s32.totalorder %s192, %s194
      %p201 = scmp.eq.s32.totalorder %s25, 1
      %p202 = por %p200, %p201
      %p203 = scmp.ne.s32.totalorder %s194, %s195
      %p204 = scmp.eq.s32.totalorder %s25, 0
      %p205 = por %p203, %p204
      %p206 = scmp.ne.s32.totalorder %s194, %s195
      %p207 = scmp.eq.s32.totalorder %s26, 1
      %p208 = por %p206, %p207
      %p210 = scmp.ne.s32.totalorder %s195, %s209
      %p211 = scmp.eq.s32.totalorder %s26, 0
      %p212 = por %p210, %p211
      %s214 = sadd.s32 %s213, 1
      %p217 = scmp.eq.s32.totalorder %s20, 1
      %p218 = scmp.ne.s32.totalorder %s213, %s215
      %p219 = scmp.eq.s32.totalorder %s20, 0
      %p220 = por %p218, %p219
      %p221 = scmp.ne.s32.totalorder %s213, %s215
      %p222 = scmp.eq.s32.totalorder %s25, 1
      %p223 = por %p221, %p222
      %p224 = scmp.ne.s32.totalorder %s215, %s216
      %p225 = scmp.eq.s32.totalorder %s25, 0
      %p226 = por %p224, %p225
      %p227 = scmp.ne.s32.totalorder %s215, %s216
      %p228 = scmp.eq.s32.totalorder %s26, 1
      %p229 = por %p227, %p228
      %p231 = scmp.ne.s32.totalorder %s216, %s230
      %p232 = scmp.eq.s32.totalorder %s26, 0
      %p233 = por %p231, %p232
      %s235 = sadd.s32 %s234, 1
      %p238 = scmp.eq.s32.totalorder %s20, 1
      %p239 = scmp.ne.s32.totalorder %s234, %s236
      %p240 = scmp.eq.s32.totalorder %s20, 0
      %p241 = por %p239, %p240
      %p242 = scmp.ne.s32.totalorder %s234, %s236
      %p243 = scmp.eq.s32.totalorder %s25, 1
      %p244 = por %p242, %p243
      %p245 = scmp.ne.s32.totalorder %s236, %s237
      %p246 = scmp.eq.s32.totalorder %s25, 0
      %p247 = por %p245, %p246
      %p248 = scmp.ne.s32.totalorder %s236, %s237
      %p249 = scmp.eq.s32.totalorder %s26, 1
      %p250 = por %p248, %p249
      %p252 = scmp.ne.s32.totalorder %s237, %s251
      %p253 = scmp.eq.s32.totalorder %s26, 0
      %p254 = por %p252, %p253
      %s256 = sadd.s32 %s255, 1
      %p259 = scmp.eq.s32.totalorder %s20, 1
      %p260 = scmp.ne.s32.totalorder %s255, %s257
      %p261 = scmp.eq.s32.totalorder %s20, 0
      %p262 = por %p260, %p261
      %p263 = scmp.ne.s32.totalorder %s255, %s257
      %p264 = scmp.eq.s32.totalorder %s25, 1
      %p265 = por %p263, %p264
      %p266 = scmp.ne.s32.totalorder %s257, %s258
      %p267 = scmp.eq.s32.totalorder %s25, 0
      %p268 = por %p266, %p267
      %p269 = scmp.ne.s32.totalorder %s257, %s258
      %p270 = scmp.eq.s32.totalorder %s26, 1
      %p271 = por %p269, %p270
      %p273 = scmp.ne.s32.totalorder %s258, %s272
      %p274 = scmp.eq.s32.totalorder %s26, 0
      %p275 = por %p273, %p274
      %s276 = ssub.s32 %s27, %s39
      %s277 = ssub.s32 %s28, %s35
      %s278 = sor.u32 %s276, %s277
      %p279 = scmp.eq.s32.totalorder %s278, 0
      %s281 = sadd.s32 %s280, 1
      %s282 = scalar_select %p279, %s280, %s281
      %p285 = pneg %p279
      %p286 = scmp.eq.s32.totalorder %s20, 1
      %p287 = por %p285, %p286
      %p288 = scmp.ne.s32.totalorder %s280, %s283
      %p289 = scmp.eq.s32.totalorder %s20, 0
      %p290 = por %p288, %p289
      %p291 = scmp.ne.s32.totalorder %s280, %s283
      %p292 = scmp.eq.s32.totalorder %s25, 1
      %p293 = por %p291, %p292
      %p294 = scmp.ne.s32.totalorder %s283, %s284
      %p295 = scmp.eq.s32.totalorder %s25, 0
      %p296 = por %p294, %p295
      %p297 = scmp.ne.s32.totalorder %s283, %s284
      %p298 = scmp.eq.s32.totalorder %s26, 1
      %p299 = por %p297, %p298
      %p301 = scmp.ne.s32.totalorder %s284, %s300
      %p302 = scmp.eq.s32.totalorder %s26, 0
      %p303 = por %p301, %p302
      %p304 = scmp.le.s32.totalorder 1, %s20
      %p305 = scmp.lt.s32.totalorder %s20, 3
      %p306 = pnand %p304, %p305
      %p307 = pneg %p306
      // Predicated region
      $region9: #{tpu_custom_call.1} parent=5 // pred_check
        _
      $region10: #{tpu_custom_call.1} parent=5 // pred_check_branch
        %309 = sbr.rel (%p306) target = $region12
      $region11: #{tpu_custom_call.1} parent=5 // pred_region
        %s310 = ssub.s32 %s20, 1
        // Predicated region
        $region13: #{tpu_custom_call.1} parent=11 // pred_check
          %p311 = pneg %p79
        $region14: #{tpu_custom_call.1} parent=11 // pred_check_branch
          %313 = sbr.rel (%p311) target = $region16
        $region15: #{tpu_custom_call.1} parent=11 // pred_region
          _
        $region16: #{tpu_custom_call.1} parent=11 // pred_fallthru
          _
        // Predicated region
        $region17: #{tpu_custom_call.1} parent=11 // pred_check
          %p314 = pneg %p100
        $region18: #{tpu_custom_call.1} parent=11 // pred_check_branch
          %316 = sbr.rel (%p314) target = $region20
        $region19: #{tpu_custom_call.1} parent=11 // pred_region
          _
        $region20: #{tpu_custom_call.1} parent=11 // pred_fallthru
          _
        // Predicated region
        $region21: #{tpu_custom_call.1} parent=11 // pred_check
          %p317 = pneg %p121
        $region22: #{tpu_custom_call.1} parent=11 // pred_check_branch
          %319 = sbr.rel (%p317) target = $region24
        $region23: #{tpu_custom_call.1} parent=11 // pred_region
          _
        $region24: #{tpu_custom_call.1} parent=11 // pred_fallthru
          _
        // Predicated region
        $region25: #{tpu_custom_call.1} parent=11 // pred_check
          %p320 = pneg %p142
        $region26: #{tpu_custom_call.1} parent=11 // pred_check_branch
          %322 = sbr.rel (%p320) target = $region28
        $region27: #{tpu_custom_call.1} parent=11 // pred_region
          _
        $region28: #{tpu_custom_call.1} parent=11 // pred_fallthru
          _
        // Predicated region
        $region29: #{tpu_custom_call.1} parent=11 // pred_check
          %p323 = pneg %p163
        $region30: #{tpu_custom_call.1} parent=11 // pred_check_branch
          %325 = sbr.rel (%p323) target = $region32
        $region31: #{tpu_custom_call.1} parent=11 // pred_region
          _
        $region32: #{tpu_custom_call.1} parent=11 // pred_fallthru
          _
        // Predicated region
        $region33: #{tpu_custom_call.1} parent=11 // pred_check
          %p326 = pneg %p184
        $region34: #{tpu_custom_call.1} parent=11 // pred_check_branch
          %328 = sbr.rel (%p326) target = $region36
        $region35: #{tpu_custom_call.1} parent=11 // pred_region
          _
        $region36: #{tpu_custom_call.1} parent=11 // pred_fallthru
          _
        // Predicated region
        $region37: #{tpu_custom_call.1} parent=11 // pred_check
          %p329 = pneg %p205
        $region38: #{tpu_custom_call.1} parent=11 // pred_check_branch
          %331 = sbr.rel (%p329) target = $region40
        $region39: #{tpu_custom_call.1} parent=11 // pred_region
          _
        $region40: #{tpu_custom_call.1} parent=11 // pred_fallthru
          _
        // Predicated region
        $region41: #{tpu_custom_call.1} parent=11 // pred_check
          %p332 = pneg %p226
        $region42: #{tpu_custom_call.1} parent=11 // pred_check_branch
          %334 = sbr.rel (%p332) target = $region44
        $region43: #{tpu_custom_call.1} parent=11 // pred_region
          _
        $region44: #{tpu_custom_call.1} parent=11 // pred_fallthru
          _
        // Predicated region
        $region45: #{tpu_custom_call.1} parent=11 // pred_check
          %p335 = pneg %p247
        $region46: #{tpu_custom_call.1} parent=11 // pred_check_branch
          %337 = sbr.rel (%p335) target = $region48
        $region47: #{tpu_custom_call.1} parent=11 // pred_region
          _
        $region48: #{tpu_custom_call.1} parent=11 // pred_fallthru
          _
        // Predicated region
        $region49: #{tpu_custom_call.1} parent=11 // pred_check
          %p338 = pneg %p268
        $region50: #{tpu_custom_call.1} parent=11 // pred_check_branch
          %340 = sbr.rel (%p338) target = $region52
        $region51: #{tpu_custom_call.1} parent=11 // pred_region
          _
        $region52: #{tpu_custom_call.1} parent=11 // pred_fallthru
          _
      $region12: #{tpu_custom_call.1} parent=5 // pred_fallthru
        _
      %p341 = scmp.lt.s32.totalorder %s20, 2
      // Predicated region
      $region53: #{tpu_custom_call.1} parent=5 // pred_check
        %p342 = pneg %p341
      $region54: #{tpu_custom_call.1} parent=5 // pred_check_branch
        %344 = sbr.rel (%p342) target = $region56
      $region55: #{tpu_custom_call.1} parent=5 // pred_region
        // Predicated region
        $region57: #{tpu_custom_call.1} parent=55 // pred_check
          %p345 = pneg %p52
        $region58: #{tpu_custom_call.1} parent=55 // pred_check_branch
          %347 = sbr.rel (%p345) target = $region60
        $region59: #{tpu_custom_call.1} parent=55 // pred_region
          %p348 = scmp.lt.s32.totalorder %s27, 1
          %s349 = scalar_select %p348, %s27, 1
          %s350 = smul.addr %s349, 8
          %s351 = scalar_lea.vmem %s0, %s350
        $region60: #{tpu_custom_call.1} parent=55 // pred_fallthru
          _
      $region56: #{tpu_custom_call.1} parent=5 // pred_fallthru
        _
      %p352 = scmp.le.s32.totalorder 1, %s20
      %p353 = scmp.lt.s32.totalorder %s20, 3
      %p354 = pnand %p352, %p353
      %p355 = pneg %p354
      // Predicated region
      $region61: #{tpu_custom_call.1} parent=5 // pred_check
        _
      $region62: #{tpu_custom_call.1} parent=5 // pred_check_branch
        %357 = sbr.rel (%p354) target = $region64
      $region63: #{tpu_custom_call.1} parent=5 // pred_region
        %s358 = ssub.s32 %s20, 1
        %p359 = scmp.lt.s32.totalorder %s29, 1
        %s360 = scalar_select %p359, %s29, 1
        %s361 = smul.addr %s360, 8
        %s362 = scalar_lea.vmem %s0, %s361
        %p363 = pneg %p58
        %p364 = pneg %p55
        %p365 = pneg %p79
        %p366 = pneg %p76
        %p367 = pneg %p100
        %p368 = pneg %p97
        %p369 = pneg %p121
        %p370 = pneg %p118
        %p371 = pneg %p142
        %p372 = pneg %p139
        %p373 = pneg %p163
        %p374 = pneg %p160
        %p375 = pneg %p184
        %p376 = pneg %p181
        %p377 = pneg %p205
        %p378 = pneg %p202
        %p379 = pneg %p226
        %p380 = pneg %p223
        %p381 = pneg %p247
        %p382 = pneg %p244
        %p383 = pneg %p268
        %p384 = pneg %p265
        %p385 = pneg %p296
        %p386 = pneg %p293
        %s387 = sand.u32 %s283, 1
        %s388 = scalar_lea.sflag [#allocation6], %s387
        %s389 = sand.u32 %s283, 1
        %s390 = smul.addr %s389, 8
        %s391 = scalar_lea.vmem [#allocation5], %s390
        %p392 = scmp.lt.s32.totalorder %s29, 1
        %s393 = scalar_select %p392, %s29, 1
        %s394 = smul.addr %s393, 8
        %s395 = scalar_lea.vmem %s0, %s394
        %p396 = scmp.eq.s32.totalorder %s30, 0
        // Predicated region
        $region65: #{tpu_custom_call.1} parent=63 // pred_check
          %p397 = pneg %p396
        $region66: #{tpu_custom_call.1} parent=63 // pred_check_branch
          %399 = sbr.rel (%p397) target = $region68
        $region67: #{tpu_custom_call.1} parent=63 // pred_region
          %v400 = vld [vmem:[%s395] sm:$0xff]
          %v401 = vld [vmem:[%s7] sm:$0x1]
          %v402 = vld [vmem:[%s8] sm:$0x1]
          %vm403 = vcmask 261120
          %v404 = vsel %vm403, %v400, 0.0
          %405 = vadd.xlane.f32.xlu0 %v404
          %v406 = vpop.xlane.xlu0 %405
          %v407 = vrcp.pop 32.0
          %v408 = vmul.f32 32.0, %v407
          %v409 = vsub.f32 1.0, %v408
          %v410 = vmul.f32 %v407, %v409
          %v411 = vadd.f32 %v407, %v410
          %vm412 = vweird.f32 %v407
          %v413 = vsel %vm412, %v407, %v411
          %v414 = vmul.f32 %v406, %v413
          %v415 = vsub.f32 %v400, %v414
          %v416 = vmul.f32 %v415, %v415
          %v417 = vsel %vm403, %v416, 0.0
          %418 = vadd.xlane.f32.xlu0 %v417
          %v419 = vpop.xlane.xlu0 %418
          %v420 = vmul.f32 %v419, %v413
          %v421 = vadd.f32 %v420, 1e-05
          %v422 = vrsqrt.pop %v421
          %v423 = vmul.f32 %v422, %v421
          %v424 = vmul.f32 %v423, %v422
          %v425 = vmul.f32 0.5, %v424
          %v426 = vsub.f32 1.5, %v425
          %v427 = vmul.f32 %v422, %v426
          %vm428 = vweird.f32 %v421
          %vm429 = vweird.f32 %v422
          %vm430 = vmor %vm428, %vm429
          %v431 = vsel %vm430, %v422, %v427
          %v432 = vmul.f32 %v415, %v431
          %v434 = vperm.slane %v401, 0
          %v436 = vmul.f32 %v432, %v434
          %v438 = vperm.slane %v402, 0
          %v440 = vadd.f32 %v436, %v438
          %v441 = vld [vmem:[%s1] sm:$0xff]
          %v442 = vld [vmem:[%s1 + $0x8] sm:$0xff]
          %v443 = vld [vmem:[%s1 + $0x10] sm:$0xff]
          %v444 = vld [vmem:[%s1 + $0x18] sm:$0xff]
          %v446 = vsel %vm403, %v440, 0
          %448 = vmatpush.msra.mxu0 0.0
          %449 = vmatpush.msra.mxu0 0.0
          %450 = vmatpush.msra.mxu0 0.0
          %451 = vmatpush.msra.mxu0 0.0
          %452 = vmatpush.msra.mxu0 0.0
          %453 = vmatpush.msra.mxu0 0.0
          %454 = vmatpush.msra.mxu0 0.0
          %455 = vmatpush.msra.mxu0 0.0
          %456 = vmatpush.msra.mxu0 0.0
          %457 = vmatpush.msra.mxu0 0.0
          %458 = vmatpush.msra.mxu0 0.0
          %459 = vmatpush.msra.mxu0 0.0
          %460 = vmatpush.msra.mxu0 %v444
          %461 = vmatpush.msra.mxu0 %v443
          %462 = vmatpush.msra.mxu0 %v442
          %463 = vmatpush.msra.mxu0 %v441
          %464 = vmatmul.f32.gmra.mxu0 %v446
          %v465 = vpop.f32.mrf.mxu0
          %v466 = vadd.f32 0.0, %v465
          %467 = vdwg.mxu0
          %v468 = vmul.f32 %v466, 0.35355338
          %vm469 = vcmask 64512
          %470 = vst.msk [vmem:[#allocation2] sm:$0xff] %vm469, %v468
          %472 = vrot.lane.b32.xlu0 %v466, 96
          %v473 = vpop.permute.xlu0 %472
          %475 = vst.msk [vmem:[#allocation3] sm:$0xff] %vm469, %v473
          %476 = vrot.lane.b32.xlu0 %v466, 64
          %v477 = vpop.permute.xlu0 %476
          %479 = vst.msk [vmem:[#allocation4] sm:$0xff] %vm469, %v477
          %481 = vrot.lane.b32.xlu0 %v468, 120
          %v482 = vpop.permute.xlu0 %481
          %s484 = scalar_lea.vmem [#allocation2], 8
          %485 = vst.msk [vmem:[%s484] sm:$0xff] %vm469, %v482
          %486 = vrot.lane.b32.xlu0 %v466, 88
          %v487 = vpop.permute.xlu0 %486
          %s489 = scalar_lea.vmem [#allocation3], 8
          %490 = vst.msk [vmem:[%s489] sm:$0xff] %vm469, %v487
          %491 = vrot.lane.b32.xlu0 %v466, 56
          %v492 = vpop.permute.xlu0 %491
          %s494 = scalar_lea.vmem [#allocation4], 8
          %495 = vst.msk [vmem:[%s494] sm:$0xff] %vm469, %v492
          %496 = vrot.lane.b32.xlu0 %v468, 112
          %v497 = vpop.permute.xlu0 %496
          %s499 = scalar_lea.vmem [#allocation2], 16
          %500 = vst.msk [vmem:[%s499] sm:$0xff] %vm469, %v497
          %501 = vrot.lane.b32.xlu0 %v466, 80
          %v502 = vpop.permute.xlu0 %501
          %s504 = scalar_lea.vmem [#allocation3], 16
          %505 = vst.msk [vmem:[%s504] sm:$0xff] %vm469, %v502
          %506 = vrot.lane.b32.xlu0 %v466, 48
          %v507 = vpop.permute.xlu0 %506
          %s509 = scalar_lea.vmem [#allocation4], 16
          %510 = vst.msk [vmem:[%s509] sm:$0xff] %vm469, %v507
          %511 = vrot.lane.b32.xlu0 %v468, 104
          %v512 = vpop.permute.xlu0 %511
          %s514 = scalar_lea.vmem [#allocation2], 24
          %515 = vst.msk [vmem:[%s514] sm:$0xff] %vm469, %v512
          %516 = vrot.lane.b32.xlu0 %v466, 72
          %v517 = vpop.permute.xlu0 %516
          %s519 = scalar_lea.vmem [#allocation3], 24
          %520 = vst.msk [vmem:[%s519] sm:$0xff] %vm469, %v517
          %521 = vrot.lane.b32.xlu0 %v466, 40
          %v522 = vpop.permute.xlu0 %521
          %s524 = scalar_lea.vmem [#allocation4], 24
          %525 = vst.msk [vmem:[%s524] sm:$0xff] %vm469, %v522
        $region68: #{tpu_custom_call.1} parent=63 // pred_fallthru
          _
        %s526 = smul.u32 %s30, 8
        %s527 = scalar_lea.vmem %s395, %s526
        %v528 = vld [vmem:[%s527] sm:$0xff]
        %s529 = scalar_lea.vmem [#allocation2], %s526
        %v530 = vld [vmem:[%s529] sm:$0xff]
        %v531 = vld [vmem:[%s529 + $0x8] sm:$0xff]
        %v532 = vld [vmem:[%s529 + $0x10] sm:$0xff]
        %v533 = vld [vmem:[%s529 + $0x18] sm:$0xff]
        %v534 = vld [vmem:[#allocation3] sm:$0xff]
        %v535 = vld [vmem:[#allocation3 + $0x8] sm:$0xff]
        %v536 = vld [vmem:[#allocation3 + $0x10] sm:$0xff]
        %v537 = vld [vmem:[#allocation3 + $0x18] sm:$0xff]
        %v538 = vld [vmem:[#allocation4] sm:$0xff]
        %v539 = vld [vmem:[#allocation4 + $0x8] sm:$0xff]
        %v540 = vld [vmem:[#allocation4 + $0x10] sm:$0xff]
        %v541 = vld [vmem:[#allocation4 + $0x18] sm:$0xff]
        %vm542 = vcmask 64512
        %v544 = vsel %vm542, %v530, 0
        %v547 = vsel %vm542, %v534, 0
        %549 = vmatpush.xpose.msra.mxu0 0.0
        %550 = vmatpush.xpose.msra.mxu0 0.0
        %551 = vmatpush.xpose.msra.mxu0 0.0
        %552 = vmatpush.xpose.msra.mxu0 0.0
        %553 = vmatpush.xpose.msra.mxu0 0.0
        %554 = vmatpush.xpose.msra.mxu0 0.0
        %555 = vmatpush.xpose.msra.mxu0 0.0
        %556 = vmatpush.xpose.msra.mxu0 0.0
        %557 = vmatpush.xpose.msra.mxu0 0.0
        %558 = vmatpush.xpose.msra.mxu0 0.0
        %559 = vmatpush.xpose.msra.mxu0 0.0
        %560 = vmatpush.xpose.msra.mxu0 0.0
        %561 = vmatpush.xpose.msra.mxu0 0.0
        %562 = vmatpush.xpose.msra.mxu0 0.0
        %563 = vmatpush.xpose.msra.mxu0 0.0
        %564 = vmatpush.xpose.msra.mxu0 %v547
        %565 = vmatmul.f32.gmra.mxu0 %v544
        %v566 = vpop.f32.mrf.mxu0
        %v567 = vadd.f32 0.0, %v566
        %568 = vdwg.mxu0
        %v570 = vsel %vm542, %v531, 0
        %v573 = vsel %vm542, %v535, 0
        %575 = vmatpush.xpose.msra.mxu0 0.0
        %576 = vmatpush.xpose.msra.mxu0 0.0
        %577 = vmatpush.xpose.msra.mxu0 0.0
        %578 = vmatpush.xpose.msra.mxu0 0.0
        %579 = vmatpush.xpose.msra.mxu0 0.0
        %580 = vmatpush.xpose.msra.mxu0 0.0
        %581 = vmatpush.xpose.msra.mxu0 0.0
        %582 = vmatpush.xpose.msra.mxu0 0.0
        %583 = vmatpush.xpose.msra.mxu0 0.0
        %584 = vmatpush.xpose.msra.mxu0 0.0
        %585 = vmatpush.xpose.msra.mxu0 0.0
        %586 = vmatpush.xpose.msra.mxu0 0.0
        %587 = vmatpush.xpose.msra.mxu0 0.0
        %588 = vmatpush.xpose.msra.mxu0 0.0
        %589 = vmatpush.xpose.msra.mxu0 0.0
        %590 = vmatpush.xpose.msra.mxu0 %v573
        %591 = vmatmul.f32.gmra.mxu0 %v570
        %v592 = vpop.f32.mrf.mxu0
        %v593 = vadd.f32 0.0, %v592
        %594 = vdwg.mxu0
        %v596 = vsel %vm542, %v532, 0
        %v599 = vsel %vm542, %v536, 0
        %601 = vmatpush.xpose.msra.mxu0 0.0
        %602 = vmatpush.xpose.msra.mxu0 0.0
        %603 = vmatpush.xpose.msra.mxu0 0.0
        %604 = vmatpush.xpose.msra.mxu0 0.0
        %605 = vmatpush.xpose.msra.mxu0 0.0
        %606 = vmatpush.xpose.msra.mxu0 0.0
        %607 = vmatpush.xpose.msra.mxu0 0.0
        %608 = vmatpush.xpose.msra.mxu0 0.0
        %609 = vmatpush.xpose.msra.mxu0 0.0
        %610 = vmatpush.xpose.msra.mxu0 0.0
        %611 = vmatpush.xpose.msra.mxu0 0.0
        %612 = vmatpush.xpose.msra.mxu0 0.0
        %613 = vmatpush.xpose.msra.mxu0 0.0
        %614 = vmatpush.xpose.msra.mxu0 0.0
        %615 = vmatpush.xpose.msra.mxu0 0.0
        %616 = vmatpush.xpose.msra.mxu0 %v599
        %617 = vmatmul.f32.gmra.mxu0 %v596
        %v618 = vpop.f32.mrf.mxu0
        %v619 = vadd.f32 0.0, %v618
        %620 = vdwg.mxu0
        %v622 = vsel %vm542, %v533, 0
        %v625 = vsel %vm542, %v537, 0
        %627 = vmatpush.xpose.msra.mxu0 0.0
        %628 = vmatpush.xpose.msra.mxu0 0.0
        %629 = vmatpush.xpose.msra.mxu0 0.0
        %630 = vmatpush.xpose.msra.mxu0 0.0
        %631 = vmatpush.xpose.msra.mxu0 0.0
        %632 = vmatpush.xpose.msra.mxu0 0.0
        %633 = vmatpush.xpose.msra.mxu0 0.0
        %634 = vmatpush.xpose.msra.mxu0 0.0
        %635 = vmatpush.xpose.msra.mxu0 0.0
        %636 = vmatpush.xpose.msra.mxu0 0.0
        %637 = vmatpush.xpose.msra.mxu0 0.0
        %638 = vmatpush.xpose.msra.mxu0 0.0
        %639 = vmatpush.xpose.msra.mxu0 0.0
        %640 = vmatpush.xpose.msra.mxu0 0.0
        %641 = vmatpush.xpose.msra.mxu0 0.0
        %642 = vmatpush.xpose.msra.mxu0 %v625
        %643 = vmatmul.f32.gmra.mxu0 %v622
        %v644 = vpop.f32.mrf.mxu0
        %v645 = vadd.f32 0.0, %v644
        %646 = vdwg.mxu0
        %v647 = vsel %vm542, %v567, -inf
        %648 = vmax.xlane.f32.xlu0 %v647
        %v649 = vpop.xlane.xlu0 %648
        %v650 = vsel %vm542, %v593, -inf
        %651 = vmax.xlane.f32.xlu0 %v650
        %v652 = vpop.xlane.xlu0 %651
        %v653 = vsel %vm542, %v619, -inf
        %654 = vmax.xlane.f32.xlu0 %v653
        %v655 = vpop.xlane.xlu0 %654
        %v656 = vsel %vm542, %v645, -inf
        %657 = vmax.xlane.f32.xlu0 %v656
        %v658 = vpop.xlane.xlu0 %657
        %v659 = vsub.f32 %v567, %v649
        %v660 = vsub.f32 %v593, %v652
        %v661 = vsub.f32 %v619, %v655
        %v662 = vsub.f32 %v645, %v658
        %v663 = vmul.f32 %v659, 1.442695
        %v664 = vpow.pop %v663
        %v665 = vmul.f32 %v660, 1.442695
        %v666 = vpow.pop %v665
        %v667 = vmul.f32 %v661, 1.442695
        %v668 = vpow.pop %v667
        %v669 = vmul.f32 %v662, 1.442695
        %v670 = vpow.pop %v669
        %v671 = vsel %vm542, %v664, 0.0
        %672 = vadd.xlane.f32.xlu0 %v671
        %v673 = vpop.xlane.xlu0 %672
        %v674 = vsel %vm542, %v666, 0.0
        %675 = vadd.xlane.f32.xlu0 %v674
        %v676 = vpop.xlane.xlu0 %675
        %v677 = vsel %vm542, %v668, 0.0
        %678 = vadd.xlane.f32.xlu0 %v677
        %v679 = vpop.xlane.xlu0 %678
        %v680 = vsel %vm542, %v670, 0.0
        %681 = vadd.xlane.f32.xlu0 %v680
        %v682 = vpop.xlane.xlu0 %681
        %v683 = vrcp.pop %v673
        %v684 = vmul.f32 %v673, %v683
        %v685 = vsub.f32 1.0, %v684
        %v686 = vmul.f32 %v683, %v685
        %v687 = vadd.f32 %v683, %v686
        %vm688 = vweird.f32 %v673
        %vm689 = vweird.f32 %v683
        %vm690 = vmor %vm688, %vm689
        %v691 = vsel %vm690, %v683, %v687
        %v692 = vand.u32 2147483647, %v673
        %vm693 = vcmp.eq.f32.partialorder %v692, 8.507059e+37
        %v694 = vand.u32 %v673, 2147483648
        %v695 = vor.u32 1.1754944e-38, %v694
        %v696 = vsel %vm693, %v695, %v691
        %v697 = vrcp.pop %v676
        %v698 = vmul.f32 %v676, %v697
        %v699 = vsub.f32 1.0, %v698
        %v700 = vmul.f32 %v697, %v699
        %v701 = vadd.f32 %v697, %v700
        %vm702 = vweird.f32 %v676
        %vm703 = vweird.f32 %v697
        %vm704 = vmor %vm702, %vm703
        %v705 = vsel %vm704, %v697, %v701
        %v706 = vand.u32 2147483647, %v676
        %vm707 = vcmp.eq.f32.partialorder %v706, 8.507059e+37
        %v708 = vand.u32 %v676, 2147483648
        %v709 = vor.u32 1.1754944e-38, %v708
        %v710 = vsel %vm707, %v709, %v705
        %v711 = vrcp.pop %v679
        %v712 = vmul.f32 %v679, %v711
        %v713 = vsub.f32 1.0, %v712
        %v714 = vmul.f32 %v711, %v713
        %v715 = vadd.f32 %v711, %v714
        %vm716 = vweird.f32 %v679
        %vm717 = vweird.f32 %v711
        %vm718 = vmor %vm716, %vm717
        %v719 = vsel %vm718, %v711, %v715
        %v720 = vand.u32 2147483647, %v679
        %vm721 = vcmp.eq.f32.partialorder %v720, 8.507059e+37
        %v722 = vand.u32 %v679, 2147483648
        %v723 = vor.u32 1.1754944e-38, %v722
        %v724 = vsel %vm721, %v723, %v719
        %v725 = vrcp.pop %v682
        %v726 = vmul.f32 %v682, %v725
        %v727 = vsub.f32 1.0, %v726
        %v728 = vmul.f32 %v725, %v727
        %v729 = vadd.f32 %v725, %v728
        %vm730 = vweird.f32 %v682
        %vm731 = vweird.f32 %v725
        %vm732 = vmor %vm730, %vm731
        %v733 = vsel %vm732, %v725, %v729
        %v734 = vand.u32 2147483647, %v682
        %vm735 = vcmp.eq.f32.partialorder %v734, 8.507059e+37
        %v736 = vand.u32 %v682, 2147483648
        %v737 = vor.u32 1.1754944e-38, %v736
        %v738 = vsel %vm735, %v737, %v733
        %v739 = vmul.f32 %v664, %v696
        %v740 = vmul.f32 %v666, %v710
        %v741 = vmul.f32 %v668, %v724
        %v742 = vmul.f32 %v670, %v738
        %v744 = vsel %vm542, %v739, 0
        %746 = vmatpush.msra.mxu0 0.0
        %747 = vmatpush.msra.mxu0 0.0
        %748 = vmatpush.msra.mxu0 0.0
        %749 = vmatpush.msra.mxu0 0.0
        %750 = vmatpush.msra.mxu0 0.0
        %751 = vmatpush.msra.mxu0 0.0
        %752 = vmatpush.msra.mxu0 0.0
        %753 = vmatpush.msra.mxu0 0.0
        %754 = vmatpush.msra.mxu0 0.0
        %755 = vmatpush.msra.mxu0 0.0
        %756 = vmatpush.msra.mxu0 0.0
        %757 = vmatpush.msra.mxu0 0.0
        %758 = vmatpush.msra.mxu0 0.0
        %759 = vmatpush.msra.mxu0 0.0
        %760 = vmatpush.msra.mxu0 0.0
        %761 = vmatpush.msra.mxu0 %v538
        %762 = vmatmul.f32.gmra.mxu0 %v744
        %v763 = vpop.f32.mrf.mxu0
        %v764 = vadd.f32 0.0, %v763
        %765 = vdwg.mxu0
        %v767 = vsel %vm542, %v740, 0
        %769 = vmatpush.msra.mxu0 0.0
        %770 = vmatpush.msra.mxu0 0.0
        %771 = vmatpush.msra.mxu0 0.0
        %772 = vmatpush.msra.mxu0 0.0
        %773 = vmatpush.msra.mxu0 0.0
        %774 = vmatpush.msra.mxu0 0.0
        %775 = vmatpush.msra.mxu0 0.0
        %776 = vmatpush.msra.mxu0 0.0
        %777 = vmatpush.msra.mxu0 0.0
        %778 = vmatpush.msra.mxu0 0.0
        %779 = vmatpush.msra.mxu0 0.0
        %780 = vmatpush.msra.mxu0 0.0
        %781 = vmatpush.msra.mxu0 0.0
        %782 = vmatpush.msra.mxu0 0.0
        %783 = vmatpush.msra.mxu0 0.0
        %784 = vmatpush.msra.mxu0 %v539
        %785 = vmatmul.f32.gmra.mxu0 %v767
        %v786 = vpop.f32.mrf.mxu0
        %v787 = vadd.f32 0.0, %v786
        %788 = vdwg.mxu0
        %v790 = vsel %vm542, %v741, 0
        %792 = vmatpush.msra.mxu0 0.0
        %793 = vmatpush.msra.mxu0 0.0
        %794 = vmatpush.msra.mxu0 0.0
        %795 = vmatpush.msra.mxu0 0.0
        %796 = vmatpush.msra.mxu0 0.0
        %797 = vmatpush.msra.mxu0 0.0
        %798 = vmatpush.msra.mxu0 0.0
        %799 = vmatpush.msra.mxu0 0.0
        %800 = vmatpush.msra.mxu0 0.0
        %801 = vmatpush.msra.mxu0 0.0
        %802 = vmatpush.msra.mxu0 0.0
        %803 = vmatpush.msra.mxu0 0.0
        %804 = vmatpush.msra.mxu0 0.0
        %805 = vmatpush.msra.mxu0 0.0
        %806 = vmatpush.msra.mxu0 0.0
        %807 = vmatpush.msra.mxu0 %v540
        %808 = vmatmul.f32.gmra.mxu0 %v790
        %v809 = vpop.f32.mrf.mxu0
        %v810 = vadd.f32 0.0, %v809
        %811 = vdwg.mxu0
        %v813 = vsel %vm542, %v742, 0
        %815 = vmatpush.msra.mxu0 0.0
        %816 = vmatpush.msra.mxu0 0.0
        %817 = vmatpush.msra.mxu0 0.0
        %818 = vmatpush.msra.mxu0 0.0
        %819 = vmatpush.msra.mxu0 0.0
        %820 = vmatpush.msra.mxu0 0.0
        %821 = vmatpush.msra.mxu0 0.0
        %822 = vmatpush.msra.mxu0 0.0
        %823 = vmatpush.msra.mxu0 0.0
        %824 = vmatpush.msra.mxu0 0.0
        %825 = vmatpush.msra.mxu0 0.0
        %826 = vmatpush.msra.mxu0 0.0
        %827 = vmatpush.msra.mxu0 0.0
        %828 = vmatpush.msra.mxu0 0.0
        %829 = vmatpush.msra.mxu0 0.0
        %830 = vmatpush.msra.mxu0 %v541
        %831 = vmatmul.f32.gmra.mxu0 %v813
        %v832 = vpop.f32.mrf.mxu0
        %v833 = vadd.f32 0.0, %v832
        %834 = vdwg.mxu0
        %v835 = vld [vmem:[%s2] sm:$0xff]
        %v836 = vld [vmem:[%s2 + $0x8] sm:$0xff]
        %v837 = vld [vmem:[%s2 + $0x10] sm:$0xff]
        %v838 = vld [vmem:[%s2 + $0x18] sm:$0xff]
        %v840 = vsel %vm542, %v764, 0
        %842 = vmatpush.msra.mxu0 0.0
        %843 = vmatpush.msra.mxu0 0.0
        %844 = vmatpush.msra.mxu0 0.0
        %845 = vmatpush.msra.mxu0 0.0
        %846 = vmatpush.msra.mxu0 0.0
        %847 = vmatpush.msra.mxu0 0.0
        %848 = vmatpush.msra.mxu0 0.0
        %849 = vmatpush.msra.mxu0 0.0
        %850 = vmatpush.msra.mxu0 0.0
        %851 = vmatpush.msra.mxu0 0.0
        %852 = vmatpush.msra.mxu0 0.0
        %853 = vmatpush.msra.mxu0 0.0
        %854 = vmatpush.msra.mxu0 0.0
        %855 = vmatpush.msra.mxu0 0.0
        %856 = vmatpush.msra.mxu0 0.0
        %857 = vmatpush.msra.mxu0 %v835
        %858 = vmatmul.f32.gmra.mxu0 %v840
        %v859 = vpop.f32.mrf.mxu0
        %v860 = vadd.f32 0.0, %v859
        %861 = vdwg.mxu0
        %v863 = vsel %vm542, %v787, 0
        %865 = vmatpush.msra.mxu0 0.0
        %866 = vmatpush.msra.mxu0 0.0
        %867 = vmatpush.msra.mxu0 0.0
        %868 = vmatpush.msra.mxu0 0.0
        %869 = vmatpush.msra.mxu0 0.0
        %870 = vmatpush.msra.mxu0 0.0
        %871 = vmatpush.msra.mxu0 0.0
        %872 = vmatpush.msra.mxu0 0.0
        %873 = vmatpush.msra.mxu0 0.0
        %874 = vmatpush.msra.mxu0 0.0
        %875 = vmatpush.msra.mxu0 0.0
        %876 = vmatpush.msra.mxu0 0.0
        %877 = vmatpush.msra.mxu0 0.0
        %878 = vmatpush.msra.mxu0 0.0
        %879 = vmatpush.msra.mxu0 0.0
        %880 = vmatpush.msra.mxu0 %v836
        %881 = vmatmul.f32.gmra.mxu0 %v863
        %v882 = vpop.f32.mrf.mxu0
        %v883 = vadd.f32 0.0, %v882
        %884 = vdwg.mxu0
        %v886 = vsel %vm542, %v810, 0
        %888 = vmatpush.msra.mxu0 0.0
        %889 = vmatpush.msra.mxu0 0.0
        %890 = vmatpush.msra.mxu0 0.0
        %891 = vmatpush.msra.mxu0 0.0
        %892 = vmatpush.msra.mxu0 0.0
        %893 = vmatpush.msra.mxu0 0.0
        %894 = vmatpush.msra.mxu0 0.0
        %895 = vmatpush.msra.mxu0 0.0
        %896 = vmatpush.msra.mxu0 0.0
        %897 = vmatpush.msra.mxu0 0.0
        %898 = vmatpush.msra.mxu0 0.0
        %899 = vmatpush.msra.mxu0 0.0
        %900 = vmatpush.msra.mxu0 0.0
        %901 = vmatpush.msra.mxu0 0.0
        %902 = vmatpush.msra.mxu0 0.0
        %903 = vmatpush.msra.mxu0 %v837
        %904 = vmatmul.f32.gmra.mxu0 %v886
        %v905 = vpop.f32.mrf.mxu0
        %v906 = vadd.f32 0.0, %v905
        %907 = vdwg.mxu0
        %v909 = vsel %vm542, %v833, 0
        %911 = vmatpush.msra.mxu0 0.0
        %912 = vmatpush.msra.mxu0 0.0
        %913 = vmatpush.msra.mxu0 0.0
        %914 = vmatpush.msra.mxu0 0.0
        %915 = vmatpush.msra.mxu0 0.0
        %916 = vmatpush.msra.mxu0 0.0
        %917 = vmatpush.msra.mxu0 0.0
        %918 = vmatpush.msra.mxu0 0.0
        %919 = vmatpush.msra.mxu0 0.0
        %920 = vmatpush.msra.mxu0 0.0
        %921 = vmatpush.msra.mxu0 0.0
        %922 = vmatpush.msra.mxu0 0.0
        %923 = vmatpush.msra.mxu0 0.0
        %924 = vmatpush.msra.mxu0 0.0
        %925 = vmatpush.msra.mxu0 0.0
        %926 = vmatpush.msra.mxu0 %v838
        %927 = vmatmul.f32.gmra.mxu0 %v909
        %v928 = vpop.f32.mrf.mxu0
        %v929 = vadd.f32 0.0, %v928
        %930 = vdwg.mxu0
        %vm931 = vcmask 261120
        %v932 = vsel %vm931, %v860, 0.0
        %v933 = vsel %vm931, %v883, 0.0
        %v934 = vadd.f32 %v932, %v933
        %v935 = vsel %vm931, %v906, 0.0
        %v936 = vadd.f32 %v934, %v935
        %v937 = vsel %vm931, %v929, 0.0
        %v938 = vadd.f32 %v936, %v937
        %v939 = vadd.f32 %v528, %v938
        %v940 = vld [vmem:[%s9] sm:$0x1]
        %v941 = vld [vmem:[%s10] sm:$0x1]
        %v942 = vsel %vm931, %v939, 0.0
        %943 = vadd.xlane.f32.xlu0 %v942
        %v944 = vpop.xlane.xlu0 %943
        %v945 = vrcp.pop 32.0
        %v946 = vmul.f32 32.0, %v945
        %v947 = vsub.f32 1.0, %v946
        %v948 = vmul.f32 %v945, %v947
        %v949 = vadd.f32 %v945, %v948
        %vm950 = vweird.f32 %v945
        %v951 = vsel %vm950, %v945, %v949
        %v952 = vmul.f32 %v944, %v951
        %v953 = vsub.f32 %v939, %v952
        %v954 = vmul.f32 %v953, %v953
        %v955 = vsel %vm931, %v954, 0.0
        %956 = vadd.xlane.f32.xlu0 %v955
        %v957 = vpop.xlane.xlu0 %956
        %v958 = vmul.f32 %v957, %v951
        %v959 = vadd.f32 %v958, 1e-05
        %v960 = vrsqrt.pop %v959
        %v961 = vmul.f32 %v960, %v959
        %v962 = vmul.f32 %v961, %v960
        %v963 = vmul.f32 0.5, %v962
        %v964 = vsub.f32 1.5, %v963
        %v965 = vmul.f32 %v960, %v964
        %vm966 = vweird.f32 %v959
        %vm967 = vweird.f32 %v960
        %vm968 = vmor %vm966, %vm967
        %v969 = vsel %vm968, %v960, %v965
        %v970 = vmul.f32 %v953, %v969
        %v972 = vperm.slane %v940, 0
        %v974 = vmul.f32 %v970, %v972
        %v976 = vperm.slane %v941, 0
        %v978 = vadd.f32 %v974, %v976
        %v979 = vld [vmem:[%s3] sm:$0xff]
        %v980 = vld [vmem:[%s3 + $0x8] sm:$0xff]
        %v981 = vld [vmem:[%s3 + $0x10] sm:$0xff]
        %v982 = vld [vmem:[%s3 + $0x18] sm:$0xff]
        %v983 = vld [vmem:[%s4] sm:$0x1]
        %v985 = vperm.slane %v983, 0
        %v988 = vsel %vm931, %v978, 0
        %990 = vmatpush.msra.mxu0 0.0
        %991 = vmatpush.msra.mxu0 0.0
        %992 = vmatpush.msra.mxu0 0.0
        %993 = vmatpush.msra.mxu0 0.0
        %994 = vmatpush.msra.mxu0 0.0
        %995 = vmatpush.msra.mxu0 0.0
        %996 = vmatpush.msra.mxu0 0.0
        %997 = vmatpush.msra.mxu0 0.0
        %998 = vmatpush.msra.mxu0 0.0
        %999 = vmatpush.msra.mxu0 0.0
        %1000 = vmatpush.msra.mxu0 0.0
        %1001 = vmatpush.msra.mxu0 0.0
        %1002 = vmatpush.msra.mxu0 %v982
        %1003 = vmatpush.msra.mxu0 %v981
        %1004 = vmatpush.msra.mxu0 %v980
        %1005 = vmatpush.msra.mxu0 %v979
        %1006 = vmatmul.f32.gmra.mxu0 %v988
        %v1007 = vpop.f32.mrf.mxu0
        %v1008 = vadd.f32 %v985, %v1007
        %1009 = vdwg.mxu0
        %v1010 = vmul.f32 %v1008, 0.5
        %v1011 = vmul.f32 %v1008, 0.70710677
        %v1012 = vmul.f32 %v1011, %v1011
        %v1013 = vmin.f32 16.0, %v1012
        %v1014 = vmul.f32 %v1013, 2.1237322e-06
        %v1015 = vadd.f32 %v1014, 0.00028619796
        %v1016 = vmul.f32 %v1013, %v1015
        %v1017 = vadd.f32 %v1016, 0.0036580483
        %v1018 = vmul.f32 %v1013, %v1017
        %v1019 = vadd.f32 %v1018, 0.05243302
        %v1020 = vmul.f32 %v1013, %v1019
        %v1021 = vadd.f32 %v1020, 0.18741608
        %v1022 = vmul.f32 %v1013, %v1021
        %v1023 = vadd.f32 %v1022, 1.1283791
        %v1024 = vmul.f32 %v1011, %v1023
        %v1025 = vmul.f32 %v1013, 3.8918573e-05
        %v1026 = vadd.f32 %v1025, 0.001143296
        %v1027 = vmul.f32 %v1013, %v1026
        %v1028 = vadd.f32 %v1027, 0.014752088
        %v1029 = vmul.f32 %v1013, %v1028
        %v1030 = vadd.f32 %v1029, 0.112945676
        %v1031 = vmul.f32 %v1013, %v1030
        %v1032 = vadd.f32 %v1031, 0.4994258
        %v1033 = vmul.f32 %v1013, %v1032
        %v1034 = vadd.f32 %v1033, 1.0
        %v1035 = vrcp.pop %v1034
        %v1036 = vmul.f32 %v1034, %v1035
        %v1037 = vsub.f32 1.0, %v1036
        %v1038 = vmul.f32 %v1035, %v1037
        %v1039 = vadd.f32 %v1035, %v1038
        %vm1040 = vweird.f32 %v1034
        %vm1041 = vweird.f32 %v1035
        %vm1042 = vmor %vm1040, %vm1041
        %v1043 = vsel %vm1042, %v1035, %v1039
        %v1044 = vand.u32 2147483647, %v1034
        %vm1045 = vcmp.eq.f32.partialorder %v1044, 8.507059e+37
        %v1046 = vand.u32 %v1034, 2147483648
        %v1047 = vor.u32 1.1754944e-38, %v1046
        %v1048 = vsel %vm1045, %v1047, %v1043
        %v1049 = vmul.f32 %v1024, %v1048
        %v1050 = vmin.f32 %v1049, 1.0
        %v1051 = vmax.f32 %v1050, -1.0
        %v1052 = vadd.f32 %v1051, 1.0
        %v1053 = vmul.f32 %v1010, %v1052
        %v1054 = vld [vmem:[%s5] sm:$0xff]
        %v1055 = vld [vmem:[%s5 + $0x8] sm:$0xff]
        %v1056 = vld [vmem:[%s5 + $0x10] sm:$0xff]
        %v1057 = vld [vmem:[%s5 + $0x18] sm:$0xff]
        %v1058 = vld [vmem:[%s5 + $0x20] sm:$0xff]
        %v1059 = vld [vmem:[%s5 + $0x28] sm:$0xff]
        %v1060 = vld [vmem:[%s5 + $0x30] sm:$0xff]
        %v1061 = vld [vmem:[%s5 + $0x38] sm:$0xff]
        %v1062 = vld [vmem:[%s5 + $0x40] sm:$0xff]
        %v1063 = vld [vmem:[%s5 + $0x48] sm:$0xff]
        %v1064 = vld [vmem:[%s5 + $0x50] sm:$0xff]
        %v1065 = vld [vmem:[%s5 + $0x58] sm:$0xff]
        %v1066 = vld [vmem:[%s5 + $0x60] sm:$0xff]
        %v1067 = vld [vmem:[%s5 + $0x68] sm:$0xff]
        %v1068 = vld [vmem:[%s5 + $0x70] sm:$0xff]
        %v1069 = vld [vmem:[%s5 + $0x78] sm:$0xff]
        %v1070 = vld [vmem:[%s6] sm:$0x1]
        %v1072 = vperm.slane %v1070, 0
        %1074 = vmatpush.msra.mxu0 %v1069
        %1075 = vmatpush.msra.mxu0 %v1068
        %1076 = vmatpush.msra.mxu0 %v1067
        %1077 = vmatpush.msra.mxu0 %v1066
        %1078 = vmatpush.msra.mxu0 %v1065
        %1079 = vmatpush.msra.mxu0 %v1064
        %1080 = vmatpush.msra.mxu0 %v1063
        %1081 = vmatpush.msra.mxu0 %v1062
        %1082 = vmatpush.msra.mxu0 %v1061
        %1083 = vmatpush.msra.mxu0 %v1060
        %1084 = vmatpush.msra.mxu0 %v1059
        %1085 = vmatpush.msra.mxu0 %v1058
        %1086 = vmatpush.msra.mxu0 %v1057
        %1087 = vmatpush.msra.mxu0 %v1056
        %1088 = vmatpush.msra.mxu0 %v1055
        %1089 = vmatpush.msra.mxu0 %v1054
        %1090 = vmatmul.f32.gmra.mxu0 %v1053
        %v1091 = vpop.f32.mrf.mxu0
        %v1092 = vadd.f32 %v1072, %v1091
        %1093 = vdwg.mxu0
        %v1094 = vadd.f32 %v939, %v1092
        %1095 = vst.msk [vmem:[%s391] sm:$0xff] %vm931, %v1094
        %s1096 = sand.u32 %s283, 1
        %s1097 = scalar_lea.sflag [#allocation6], %s1096
        %s1098 = sand.u32 %s283, 1
        %s1099 = smul.addr %s1098, 8
        %s1100 = scalar_lea.vmem [#allocation5], %s1099
        // Predicated region
        $region69: #{tpu_custom_call.1} parent=63 // pred_check
          %p1101 = pneg %p293
        $region70: #{tpu_custom_call.1} parent=63 // pred_check_branch
          %1103 = sbr.rel (%p1101) target = $region72
        $region71: #{tpu_custom_call.1} parent=63 // pred_region
          %1105 = vsyncadd %s1097, 0
          %s1106 = sadd.s32 %s30, %s29
          %s1107 = smul.addr %s1106, 8
          %s1108 = scalar_lea.hbm %s11, %s1107
          %s1110 = sshll.u32 %s1100, 4
          %s1111 = int_to_ptr.vmem [resolvable:$true] %s1110
          %s1112 = sshll.u32 %s1108, 4
          %s1113 = int_to_ptr.hbm [resolvable:$true] %s1112
          %1115 = dma.vmem_to_hbm [thread:$0]  %s1111, 128, %s1113, %s1097
        $region72: #{tpu_custom_call.1} parent=63 // pred_fallthru
          _
      $region64: #{tpu_custom_call.1} parent=5 // pred_fallthru
        _
      %p1116 = scmp.le.s32.totalorder 2, %s20
      // Predicated region
      $region73: #{tpu_custom_call.1} parent=5 // pred_check
        %p1117 = pneg %p1116
      $region74: #{tpu_custom_call.1} parent=5 // pred_check_branch
        %1119 = sbr.rel (%p1117) target = $region76
      $region75: #{tpu_custom_call.1} parent=5 // pred_region
        %s1120 = ssub.s32 %s20, 2
        // Predicated region
        $region77: #{tpu_custom_call.1} parent=75 // pred_check
          %p1121 = pneg %p299
        $region78: #{tpu_custom_call.1} parent=75 // pred_check_branch
          %1123 = sbr.rel (%p1121) target = $region80
        $region79: #{tpu_custom_call.1} parent=75 // pred_region
          %s1124 = sand.u32 %s284, 1
          %s1125 = scalar_lea.sflag [#allocation6], %s1124
          %s1126 = sand.u32 %s284, 1
          %s1127 = smul.addr %s1126, 8
          %s1128 = scalar_lea.vmem [#allocation5], %s1127
          %1130 = dma.done %s1125, 128
        $region80: #{tpu_custom_call.1} parent=75 // pred_fallthru
          _
      $region76: #{tpu_custom_call.1} parent=5 // pred_fallthru
        _
    $region6: #{tpu_custom_call.1} parent=1 // loop_footer
      %s24 = sadd.s32 1, %s20
    $region7: #{tpu_custom_call.1} parent=1 // loop_footer_branch
      %19 = sbr.rel target = $region3
    $region8: #{tpu_custom_call.1} parent=1 // loop_exit
      _
    %1131 = vsyncpa [#allocation6], 1
    %s1132 = scalar_lea.sflag [#allocation6], 1
    %1133 = vsyncpa %s1132, 1

</llo_original>
